<compile_context>
chip_gen: v5e
topology: v5e:2x2
jax: 0.10.0
libtpu: 0.0.40
codegen_flags: <defaults>
</compile_context>

<pallas_src>
import functools

import jax
import jax.numpy as jnp
from jax import lax
from jax.experimental import pallas as pl
from jax.experimental.pallas import tpu as pltpu  # noqa: F401  (defaults are fine at this size)


def _round_up(v, m):
    return ((v + m - 1) // m) * m


def _full_spec(shape):
    zeros = (0,) * len(shape)
    return pl.BlockSpec(shape, lambda: zeros)


# ---------------------------------------------------------------------------
# Fused kernel: conv1+pool -> conv2+pool -> fc1 -> fc2 -> fc3
# ---------------------------------------------------------------------------

def _fused_kernel(p1_ref, w1_ref, b1_ref, w2_ref, b2_ref, ssel_ref,
                  wf1_ref, bf1_ref, wf2_ref, bf2_ref, wf3_ref, bf3_ref, o_ref,
                  *, n_batch, width, shifts2, pool2_shifts,
                  kd2, kd2p, npos, kfc, kfcp):
    f32 = jnp.float32
    bf16 = jnp.bfloat16

    # ---- Stage 1: conv1 over pool-grouped im2col patches (ONE matmul). ------
    # p1 columns are grouped by the 2x2 pool-window position q, so the pool is
    # a max over 4 aligned column groups; bias + ReLU hoisted after the max.
    z1 = jnp.dot(w1_ref[...], p1_ref[...], preferred_element_type=f32)  # (c1p, 4*width)
    pool1 = z1[:, 0:width]
    for q in range(1, 4):
        pool1 = jnp.maximum(pool1, z1[:, q * width:(q + 1) * width])
    pool1 = jnp.maximum(pool1 + b1_ref[...], 0.0)                       # (c1p, width)

    # ---- Stage 2: conv2 as ONE matmul over 25 shifted copies of pool1. ------
    # pool1 columns = n*seg + y*wp1 + x, so input pixel (y+dy, x+dx) of output
    # position (y, x) sits at a static lane shift of dy*wp1 + dx.
    c1p = pool1.shape[0]
    a1w = jnp.concatenate([pool1, jnp.zeros((c1p, 128), f32)], axis=1)
    pieces = [a1w[:, s:s + width] for s in shifts2]
    if kd2p > kd2:
        pieces.append(jnp.zeros((kd2p - kd2, width), f32))
    stack2 = jnp.concatenate(pieces, axis=0).astype(bf16)               # (kd2p, width)
    z2 = jnp.dot(w2_ref[...], stack2, preferred_element_type=f32)       # (cout2, width)

    # 2x2 max-pool of the conv2 output via shifted maxima; bias+ReLU hoisted.
    cout2 = z2.shape[0]
    z2w = jnp.concatenate([z2, jnp.zeros((cout2, 128), f32)], axis=1)
    pooled = z2w[:, 0:width]
    for s in pool2_shifts[1:]:
        pooled = jnp.maximum(pooled, z2w[:, s:s + width])
    p2 = jnp.maximum(pooled + b2_ref[...], 0.0).astype(bf16)            # (cout2, width)

    # ---- Bridge to FC: gather the npos valid pooled positions per sample ----
    # with a 0/1 selection matmul, then restack so the flattened feature axis
    # (s, c) is on sublanes and the batch axis on lanes.
    g2 = jnp.dot(p2, ssel_ref[...], preferred_element_type=f32)         # (cout2, gcols)
    gp = [g2[:, s * n_batch:(s + 1) * n_batch] for s in range(npos)]
    if kfcp > kfc:
        gp.append(jnp.zeros((kfcp - kfc, n_batch), f32))
    g = jnp.concatenate(gp, axis=0).astype(bf16)                        # (kfcp, n_batch)

    # ---- FC stack (units on sublanes, batch on lanes), bf16 in / f32 acc. ---
    h = jnp.dot(wf1_ref[...], g, preferred_element_type=f32) + bf1_ref[...]
    h = jnp.maximum(h, 0.0).astype(bf16)
    h = jnp.dot(wf2_ref[...], h, preferred_element_type=f32) + bf2_ref[...]
    h = jnp.maximum(h, 0.0).astype(bf16)
    o_ref[...] = jnp.dot(wf3_ref[...], h, preferred_element_type=f32) + bf3_ref[...]


# ---------------------------------------------------------------------------
# Wrapper: layout plumbing (im2col for conv1, weight permutations, padding)
# ---------------------------------------------------------------------------

def _build_conv1_patches(x, k, seg, kd_pad):
    """x (N,C,H,W) -> (kd_pad, 4*N*seg) f32 patches.

    Rows: (ci, dy, dx).  Cols: q*(N*seg) + n*seg + y*wp + x, where q = qy*2+qx
    is the position inside the 2x2 max-pool window and (y, x) the pooled map."""
    n, c, h, w = x.shape
    ho, wo = h - k + 1, w - k + 1
    hp, wp = ho // 2, wo // 2
    slabs = [x[:, :, dy:dy + ho, dx:dx + wo] for dy in range(k) for dx in range(k)]
    p = jnp.stack(slabs, axis=0)                 # (k*k, n, c, ho, wo)
    p = p.reshape(k * k, n, c, hp, 2, wp, 2)     # oy -> (y, qy), ox -> (x, qx)
    p = p.transpose(2, 0, 4, 6, 1, 3, 5)         # (c, k*k, qy, qx, n, y, x)
    p = p.reshape(c * k * k, 4, n, hp * wp)
    p = jnp.pad(p, ((0, kd_pad - c * k * k), (0, 0), (0, 0), (0, seg - hp * wp)))
    return p.reshape(kd_pad, 4 * n * seg)


def classical_net_conv_forward(x, c1w, c1b, c2w, c2b, f1w, f1b, f2w, f2b, f3w, f3b):
    """Full Classical_Net_conv forward.  Parameters in PyTorch layout:
    conv weights (Cout, Cin, k, k); linear weights (out, in)."""
    n, cin, h, w = x.shape
    cout1, _, k, _ = c1w.shape
    cout2 = c2w.shape[0]
    d1, d2, kcls = f1w.shape[0], f2w.shape[0], f3w.shape[0]

    ho1, wo1 = h - k + 1, w - k + 1
    hp1, wp1 = ho1 // 2, wo1 // 2
    ho2, wo2 = hp1 - k + 1, wp1 - k + 1
    hp2, wp2 = ho2 // 2, wo2 // 2
    assert ho1 % 2 == 0 and wo1 % 2 == 0 and ho2 % 2 == 0 and wo2 % 2 == 0, \
        "even conv-output sizes expected (MaxPool2d(2,2) without truncation)"
    assert f1w.shape[1] == cout2 * hp2 * wp2

    # Padded sizes (contraction dims -> multiples of 128, channels -> 8).
    seg = _round_up(hp1 * wp1, 128)          # per-sample lane frame (196 -> 256)
    width = n * seg
    kd1, kd1p = cin * k * k, _round_up(cin * k * k, 128)   # 75 -> 128
    c1p = _round_up(cout1, 8)                               # 6 -> 8
    kd2, kd2p = k * k * c1p, _round_up(k * k * c1p, 128)    # 200 -> 256
    npos = hp2 * wp2                                        # 25
    kfc, kfcp = npos * cout2, _round_up(npos * cout2, 128)  # 400 -> 512
    d1p, d2p = _round_up(d1, 128), _round_up(d2, 128)       # 120/84 -> 128
    kclsp = _round_up(kcls, 8)
    gcols = _round_up(n * npos, 128)

    bf16 = jnp.bfloat16
    f32 = jnp.float32

    # conv1 patches (grouped by pool-window position), bf16 for the MXU.
    p1 = _build_conv1_patches(x, k, seg, kd1p).astype(bf16)

    # conv1 weights -> (c1p, kd1p); bias as a column vector.
    w1 = jnp.pad(c1w.reshape(cout1, kd1), ((0, c1p - cout1), (0, kd1p - kd1))).astype(bf16)
    b1 = jnp.pad(c1b, (0, c1p - cout1)).reshape(c1p, 1).astype(f32)

    # conv2 weights -> (cout2, kd2p) with cols ordered (dy*k+dx)*c1p + ci to
    # match the in-kernel shifted stack.
    w2 = jnp.pad(c2w.transpose(0, 2, 3, 1), ((0, 0), (0, 0), (0, 0), (0, c1p - cout1)))
    w2 = jnp.pad(w2.reshape(cout2, kd2), ((0, 0), (0, kd2p - kd2))).astype(bf16)
    b2 = c2b.reshape(cout2, 1).astype(f32)

    # 0/1 selection matrix: ssel[col, n_batch*s + b] = 1 iff
    # col == b*seg + (2*py)*wp1 + 2*px  with  s = py*wp2 + px.
    s_idx = jnp.arange(npos)
    off = 2 * (s_idx // wp2) * wp1 + 2 * (s_idx % wp2)
    rows = (jnp.arange(n)[None, :] * seg + off[:, None]).reshape(-1)
    cols = (n * s_idx[:, None] + jnp.arange(n)[None, :]).reshape(-1)
    ssel = jnp.zeros((width, gcols), f32).at[rows, cols].set(1.0).astype(bf16)

    # fc1 weights permuted so columns match G's row order (s, c).
    wf1 = f1w.reshape(d1, cout2, npos).transpose(0, 2, 1).reshape(d1, kfc)
    wf1 = jnp.pad(wf1, ((0, d1p - d1), (0, kfcp - kfc))).astype(bf16)
    bf1_ = jnp.pad(f1b, (0, d1p - d1)).reshape(d1p, 1).astype(f32)

    wf2 = jnp.pad(f2w, ((0, d2p - d2), (0, d1p - d1))).astype(bf16)
    bf2_ = jnp.pad(f2b, (0, d2p - d2)).reshape(d2p, 1).astype(f32)

    wf3 = jnp.pad(f3w, ((0, kclsp - kcls), (0, d2p - d2))).astype(bf16)
    bf3_ = jnp.pad(f3b, (0, kclsp - kcls)).reshape(kclsp, 1).astype(f32)

    shifts2 = tuple(dy * wp1 + dx for dy in range(k) for dx in range(k))
    pool2_shifts = (0, 1, wp1, wp1 + 1)

    kernel = functools.partial(
        _fused_kernel, n_batch=n, width=width, shifts2=shifts2,
        pool2_shifts=pool2_shifts, kd2=kd2, kd2p=kd2p, npos=npos,
        kfc=kfc, kfcp=kfcp)

    flops = 2 * (c1p * kd1p * 4 * width + cout2 * kd2p * width
                 + cout2 * width * gcols + d1p * kfcp * n + d2p * d1p * n
                 + kclsp * d2p * n)
    bytes_accessed = (2 * (p1.size + w1.size + w2.size + ssel.size + wf1.size
                           + wf2.size + wf3.size)
                      + 4 * (b1.size + b2.size + bf1_.size + bf2_.size + bf3_.size)
                      + 4 * kclsp * n)

    out = pl.pallas_call(
        kernel,
        out_shape=jax.ShapeDtypeStruct((kclsp, n), f32),
        in_specs=[
            _full_spec((kd1p, 4 * width)),
            _full_spec((c1p, kd1p)),
            _full_spec((c1p, 1)),
            _full_spec((cout2, kd2p)),
            _full_spec((cout2, 1)),
            _full_spec((width, gcols)),
            _full_spec((d1p, kfcp)),
            _full_spec((d1p, 1)),
            _full_spec((d2p, d1p)),
            _full_spec((d2p, 1)),
            _full_spec((kclsp, d2p)),
            _full_spec((kclsp, 1)),
        ],
        out_specs=_full_spec((kclsp, n)),
        cost_estimate=pl.CostEstimate(
            flops=flops, transcendentals=0, bytes_accessed=bytes_accessed),
    )(p1, w1, b1, w2, b2, ssel, wf1, bf1_, wf2, bf2_, wf3, bf3_)

    return out[:kcls, :].T   # (N, K); padded logits rows dropped, transpose is free XLA


# ---------------------------------------------------------------------------
# Pure-JAX reference for correctness checking
# ---------------------------------------------------------------------------

def reference_forward(x, c1w, c1b, c2w, c2b, f1w, f1b, f2w, f2b, f3w, f3b):
    dn = ("NCHW", "OIHW", "NCHW")

    def pool(v):
        return lax.reduce_window(v, -jnp.inf, lax.max, (1, 1, 2, 2), (1, 1, 2, 2), "VALID")

    y = lax.conv_general_dilated(x, c1w, (1, 1), "VALID", dimension_numbers=dn)
    y = pool(jnp.maximum(y + c1b[None, :, None, None], 0.0))
    y = lax.conv_general_dilated(y, c2w, (1, 1), "VALID", dimension_numbers=dn)
    y = pool(jnp.maximum(y + c2b[None, :, None, None], 0.0))
    y = y.reshape(y.shape[0], -1)
    y = jnp.maximum(y @ f1w.T + f1b, 0.0)
    y = jnp.maximum(y @ f2w.T + f2b, 0.0)
    return y @ f3w.T + f3b


# ---------------------------------------------------------------------------
# Demo / smoke test
# ---------------------------------------------------------------------------

if __name__ == "__main__":
    # Non-MNIST path: colors=3, 32x32 input, fc1 input = 16*5*5 = 400.
    N, C, H, W = 2, 3, 32, 32
    K = 10

    key = jax.random.PRNGKey(0)
    ks = jax.random.split(key, 11)

    def uinit(k_, shape, fan_in):
        bound = 1.0 / (fan_in ** 0.5)   # PyTorch Conv/Linear-like fan-in bound
        return jax.random.uniform(k_, shape, minval=-bound, maxval=bound, dtype=jnp.float32)

    x = jax.random.normal(ks[0], (N, C, H, W), dtype=jnp.float32)

    c1w = uinit(ks[1], (6, C, 5, 5), C * 25)
    c1b = uinit(ks[2], (6,), C * 25)
    c2w = uinit(ks[3], (16, 6, 5, 5), 6 * 25)
    c2b = uinit(ks[4], (16,), 6 * 25)
    f1w = uinit(ks[5], (120, 16 * 5 * 5), 16 * 5 * 5)
    f1b = uinit(ks[6], (120,), 16 * 5 * 5)
    f2w = uinit(ks[7], (84, 120), 120)
    f2b = uinit(ks[8], (84,), 120)
    f3w = uinit(ks[9], (K, 84), 84)
    f3b = uinit(ks[10], (K,), 84)

    fwd = jax.jit(classical_net_conv_forward)
    out = jax.block_until_ready(fwd(x, c1w, c1b, c2w, c2b, f1w, f1b, f2w, f2b, f3w, f3b))

    ref = reference_forward(x, c1w, c1b, c2w, c2b, f1w, f1b, f2w, f2b, f3w, f3b)
    assert out.shape == (N, K), out.shape
    # bf16 MXU inputs with f32 accumulation; tolerance sized for 5 chained layers.
    assert jnp.allclose(out, ref, atol=3e-2, rtol=3e-2), "mismatch vs reference"

    print("KERNEL_OK")
</pallas_src>

<mosaic_0001>
module attributes {stable_mosaic.version = 11 : i64} {
  func.func @_fused_kernel(%arg0: memref<128x2048xbf16, #tpu.memory_space<vmem>>, %arg1: memref<8x128xbf16, #tpu.memory_space<vmem>>, %arg2: memref<8x1xf32, #tpu.memory_space<vmem>>, %arg3: memref<16x256xbf16, #tpu.memory_space<vmem>>, %arg4: memref<16x1xf32, #tpu.memory_space<vmem>>, %arg5: memref<512x128xbf16, #tpu.memory_space<vmem>>, %arg6: memref<128x512xbf16, #tpu.memory_space<vmem>>, %arg7: memref<128x1xf32, #tpu.memory_space<vmem>>, %arg8: memref<128x128xbf16, #tpu.memory_space<vmem>>, %arg9: memref<128x1xf32, #tpu.memory_space<vmem>>, %arg10: memref<16x128xbf16, #tpu.memory_space<vmem>>, %arg11: memref<16x1xf32, #tpu.memory_space<vmem>>, %arg12: memref<16x2xf32, #tpu.memory_space<vmem>>) attributes {dimension_semantics = [], scalar_prefetch = 0 : i64, scratch_operands = 0 : i64, tpu.core_type = #tpu.core_type<tc>} {
    %c0 = arith.constant 0 : index
    %c0_0 = arith.constant 0 : index
    %0 = vector.load %arg1[%c0, %c0_0] : memref<8x128xbf16, #tpu.memory_space<vmem>>, vector<8x128xbf16>
    %c0_1 = arith.constant 0 : index
    %c0_2 = arith.constant 0 : index
    %1 = vector.load %arg0[%c0_1, %c0_2] : memref<128x2048xbf16, #tpu.memory_space<vmem>>, vector<128x2048xbf16>
    %cst = arith.constant dense<0.000000e+00> : vector<8x2048xf32>
    %2 = tpu.matmul %0, %1, %cst {dimension_numbers = #tpu.dot_dimension_numbers<[1], [0], [0], [1], [0, 0, 1, 1], [], []>} : vector<8x128xbf16>, vector<128x2048xbf16>, vector<8x2048xf32> -> vector<8x2048xf32>
    %3 = vector.extract_strided_slice %2 {offsets = [0, 0], sizes = [8, 512], strides = [1, 1]} : vector<8x2048xf32> to vector<8x512xf32>
    %4 = vector.extract_strided_slice %2 {offsets = [0, 512], sizes = [8, 512], strides = [1, 1]} : vector<8x2048xf32> to vector<8x512xf32>
    %5 = arith.maximumf %3, %4 : vector<8x512xf32>
    %6 = vector.extract_strided_slice %2 {offsets = [0, 1024], sizes = [8, 512], strides = [1, 1]} : vector<8x2048xf32> to vector<8x512xf32>
    %7 = arith.maximumf %5, %6 : vector<8x512xf32>
    %8 = vector.extract_strided_slice %2 {offsets = [0, 1536], sizes = [8, 512], strides = [1, 1]} : vector<8x2048xf32> to vector<8x512xf32>
    %9 = arith.maximumf %7, %8 : vector<8x512xf32>
    %c0_3 = arith.constant 0 : index
    %c0_4 = arith.constant 0 : index
    %10 = vector.load %arg2[%c0_3, %c0_4] : memref<8x1xf32, #tpu.memory_space<vmem>>, vector<8x1xf32>
    %11 = vector.broadcast %10 : vector<8x1xf32> to vector<8x512xf32>
    %12 = arith.addf %9, %11 : vector<8x512xf32>
    %cst_5 = arith.constant 0.000000e+00 : f32
    %13 = vector.broadcast %cst_5 : f32 to vector<8x512xf32>
    %14 = arith.maximumf %12, %13 : vector<8x512xf32>
    %cst_6 = arith.constant 0.000000e+00 : f32
    %15 = vector.broadcast %cst_6 : f32 to vector<8x128xf32>
    %16 = tpu.concatenate %14, %15 in 1 : vector<8x512xf32>, vector<8x128xf32> -> vector<8x640xf32>
    %17 = vector.extract_strided_slice %16 {offsets = [0, 0], sizes = [8, 512], strides = [1, 1]} : vector<8x640xf32> to vector<8x512xf32>
    %18 = vector.extract_strided_slice %16 {offsets = [0, 1], sizes = [8, 512], strides = [1, 1]} : vector<8x640xf32> to vector<8x512xf32>
    %19 = vector.extract_strided_slice %16 {offsets = [0, 2], sizes = [8, 512], strides = [1, 1]} : vector<8x640xf32> to vector<8x512xf32>
    %20 = vector.extract_strided_slice %16 {offsets = [0, 3], sizes = [8, 512], strides = [1, 1]} : vector<8x640xf32> to vector<8x512xf32>
    %21 = vector.extract_strided_slice %16 {offsets = [0, 4], sizes = [8, 512], strides = [1, 1]} : vector<8x640xf32> to vector<8x512xf32>
    %22 = vector.extract_strided_slice %16 {offsets = [0, 14], sizes = [8, 512], strides = [1, 1]} : vector<8x640xf32> to vector<8x512xf32>
    %23 = vector.extract_strided_slice %16 {offsets = [0, 15], sizes = [8, 512], strides = [1, 1]} : vector<8x640xf32> to vector<8x512xf32>
    %24 = vector.extract_strided_slice %16 {offsets = [0, 16], sizes = [8, 512], strides = [1, 1]} : vector<8x640xf32> to vector<8x512xf32>
    %25 = vector.extract_strided_slice %16 {offsets = [0, 17], sizes = [8, 512], strides = [1, 1]} : vector<8x640xf32> to vector<8x512xf32>
    %26 = vector.extract_strided_slice %16 {offsets = [0, 18], sizes = [8, 512], strides = [1, 1]} : vector<8x640xf32> to vector<8x512xf32>
    %27 = vector.extract_strided_slice %16 {offsets = [0, 28], sizes = [8, 512], strides = [1, 1]} : vector<8x640xf32> to vector<8x512xf32>
    %28 = vector.extract_strided_slice %16 {offsets = [0, 29], sizes = [8, 512], strides = [1, 1]} : vector<8x640xf32> to vector<8x512xf32>
    %29 = vector.extract_strided_slice %16 {offsets = [0, 30], sizes = [8, 512], strides = [1, 1]} : vector<8x640xf32> to vector<8x512xf32>
    %30 = vector.extract_strided_slice %16 {offsets = [0, 31], sizes = [8, 512], strides = [1, 1]} : vector<8x640xf32> to vector<8x512xf32>
    %31 = vector.extract_strided_slice %16 {offsets = [0, 32], sizes = [8, 512], strides = [1, 1]} : vector<8x640xf32> to vector<8x512xf32>
    %32 = vector.extract_strided_slice %16 {offsets = [0, 42], sizes = [8, 512], strides = [1, 1]} : vector<8x640xf32> to vector<8x512xf32>
    %33 = vector.extract_strided_slice %16 {offsets = [0, 43], sizes = [8, 512], strides = [1, 1]} : vector<8x640xf32> to vector<8x512xf32>
    %34 = vector.extract_strided_slice %16 {offsets = [0, 44], sizes = [8, 512], strides = [1, 1]} : vector<8x640xf32> to vector<8x512xf32>
    %35 = vector.extract_strided_slice %16 {offsets = [0, 45], sizes = [8, 512], strides = [1, 1]} : vector<8x640xf32> to vector<8x512xf32>
    %36 = vector.extract_strided_slice %16 {offsets = [0, 46], sizes = [8, 512], strides = [1, 1]} : vector<8x640xf32> to vector<8x512xf32>
    %37 = vector.extract_strided_slice %16 {offsets = [0, 56], sizes = [8, 512], strides = [1, 1]} : vector<8x640xf32> to vector<8x512xf32>
    %38 = vector.extract_strided_slice %16 {offsets = [0, 57], sizes = [8, 512], strides = [1, 1]} : vector<8x640xf32> to vector<8x512xf32>
    %39 = vector.extract_strided_slice %16 {offsets = [0, 58], sizes = [8, 512], strides = [1, 1]} : vector<8x640xf32> to vector<8x512xf32>
    %40 = vector.extract_strided_slice %16 {offsets = [0, 59], sizes = [8, 512], strides = [1, 1]} : vector<8x640xf32> to vector<8x512xf32>
    %41 = vector.extract_strided_slice %16 {offsets = [0, 60], sizes = [8, 512], strides = [1, 1]} : vector<8x640xf32> to vector<8x512xf32>
    %cst_7 = arith.constant 0.000000e+00 : f32
    %42 = vector.broadcast %cst_7 : f32 to vector<56x512xf32>
    %43 = tpu.concatenate %17, %18, %19, %20, %21, %22, %23, %24, %25, %26, %27, %28, %29, %30, %31, %32 in 0 : vector<8x512xf32>, vector<8x512xf32>, vector<8x512xf32>, vector<8x512xf32>, vector<8x512xf32>, vector<8x512xf32>, vector<8x512xf32>, vector<8x512xf32>, vector<8x512xf32>, vector<8x512xf32>, vector<8x512xf32>, vector<8x512xf32>, vector<8x512xf32>, vector<8x512xf32>, vector<8x512xf32>, vector<8x512xf32> -> vector<128x512xf32>
    %44 = tpu.concatenate %33, %34, %35, %36, %37, %38, %39, %40, %41, %42 in 0 : vector<8x512xf32>, vector<8x512xf32>, vector<8x512xf32>, vector<8x512xf32>, vector<8x512xf32>, vector<8x512xf32>, vector<8x512xf32>, vector<8x512xf32>, vector<8x512xf32>, vector<56x512xf32> -> vector<128x512xf32>
    %45 = tpu.concatenate %43, %44 in 0 : vector<128x512xf32>, vector<128x512xf32> -> vector<256x512xf32>
    %46 = arith.truncf %45 : vector<256x512xf32> to vector<256x512xbf16>
    %c0_8 = arith.constant 0 : index
    %c0_9 = arith.constant 0 : index
    %47 = vector.load %arg3[%c0_8, %c0_9] : memref<16x256xbf16, #tpu.memory_space<vmem>>, vector<16x256xbf16>
    %cst_10 = arith.constant dense<0.000000e+00> : vector<16x512xf32>
    %48 = tpu.matmul %47, %46, %cst_10 {dimension_numbers = #tpu.dot_dimension_numbers<[1], [0], [0], [1], [0, 0, 1, 1], [], []>} : vector<16x256xbf16>, vector<256x512xbf16>, vector<16x512xf32> -> vector<16x512xf32>
    %cst_11 = arith.constant 0.000000e+00 : f32
    %49 = vector.broadcast %cst_11 : f32 to vector<16x128xf32>
    %50 = tpu.concatenate %48, %49 in 1 : vector<16x512xf32>, vector<16x128xf32> -> vector<16x640xf32>
    %51 = vector.extract_strided_slice %50 {offsets = [0, 0], sizes = [16, 512], strides = [1, 1]} : vector<16x640xf32> to vector<16x512xf32>
    %52 = vector.extract_strided_slice %50 {offsets = [0, 1], sizes = [16, 512], strides = [1, 1]} : vector<16x640xf32> to vector<16x512xf32>
    %53 = arith.maximumf %51, %52 : vector<16x512xf32>
    %54 = vector.extract_strided_slice %50 {offsets = [0, 14], sizes = [16, 512], strides = [1, 1]} : vector<16x640xf32> to vector<16x512xf32>
    %55 = arith.maximumf %53, %54 : vector<16x512xf32>
    %56 = vector.extract_strided_slice %50 {offsets = [0, 15], sizes = [16, 512], strides = [1, 1]} : vector<16x640xf32> to vector<16x512xf32>
    %57 = arith.maximumf %55, %56 : vector<16x512xf32>
    %c0_12 = arith.constant 0 : index
    %c0_13 = arith.constant 0 : index
    %58 = vector.load %arg4[%c0_12, %c0_13] : memref<16x1xf32, #tpu.memory_space<vmem>>, vector<16x1xf32>
    %59 = vector.broadcast %58 : vector<16x1xf32> to vector<16x512xf32>
    %60 = arith.addf %57, %59 : vector<16x512xf32>
    %cst_14 = arith.constant 0.000000e+00 : f32
    %61 = vector.broadcast %cst_14 : f32 to vector<16x512xf32>
    %62 = arith.maximumf %60, %61 : vector<16x512xf32>
    %63 = arith.truncf %62 : vector<16x512xf32> to vector<16x512xbf16>
    %c0_15 = arith.constant 0 : index
    %c0_16 = arith.constant 0 : index
    %64 = vector.load %arg5[%c0_15, %c0_16] : memref<512x128xbf16, #tpu.memory_space<vmem>>, vector<512x128xbf16>
    %cst_17 = arith.constant dense<0.000000e+00> : vector<16x128xf32>
    %65 = tpu.matmul %63, %64, %cst_17 {dimension_numbers = #tpu.dot_dimension_numbers<[1], [0], [0], [1], [0, 0, 1, 1], [], []>} : vector<16x512xbf16>, vector<512x128xbf16>, vector<16x128xf32> -> vector<16x128xf32>
    %66 = vector.extract_strided_slice %65 {offsets = [0, 0], sizes = [16, 2], strides = [1, 1]} : vector<16x128xf32> to vector<16x2xf32>
    %67 = vector.extract_strided_slice %65 {offsets = [0, 2], sizes = [16, 2], strides = [1, 1]} : vector<16x128xf32> to vector<16x2xf32>
    %68 = vector.extract_strided_slice %65 {offsets = [0, 4], sizes = [16, 2], strides = [1, 1]} : vector<16x128xf32> to vector<16x2xf32>
    %69 = vector.extract_strided_slice %65 {offsets = [0, 6], sizes = [16, 2], strides = [1, 1]} : vector<16x128xf32> to vector<16x2xf32>
    %70 = vector.extract_strided_slice %65 {offsets = [0, 8], sizes = [16, 2], strides = [1, 1]} : vector<16x128xf32> to vector<16x2xf32>
    %71 = vector.extract_strided_slice %65 {offsets = [0, 10], sizes = [16, 2], strides = [1, 1]} : vector<16x128xf32> to vector<16x2xf32>
    %72 = vector.extract_strided_slice %65 {offsets = [0, 12], sizes = [16, 2], strides = [1, 1]} : vector<16x128xf32> to vector<16x2xf32>
    %73 = vector.extract_strided_slice %65 {offsets = [0, 14], sizes = [16, 2], strides = [1, 1]} : vector<16x128xf32> to vector<16x2xf32>
    %74 = vector.extract_strided_slice %65 {offsets = [0, 16], sizes = [16, 2], strides = [1, 1]} : vector<16x128xf32> to vector<16x2xf32>
    %75 = vector.extract_strided_slice %65 {offsets = [0, 18], sizes = [16, 2], strides = [1, 1]} : vector<16x128xf32> to vector<16x2xf32>
    %76 = vector.extract_strided_slice %65 {offsets = [0, 20], sizes = [16, 2], strides = [1, 1]} : vector<16x128xf32> to vector<16x2xf32>
    %77 = vector.extract_strided_slice %65 {offsets = [0, 22], sizes = [16, 2], strides = [1, 1]} : vector<16x128xf32> to vector<16x2xf32>
    %78 = vector.extract_strided_slice %65 {offsets = [0, 24], sizes = [16, 2], strides = [1, 1]} : vector<16x128xf32> to vector<16x2xf32>
    %79 = vector.extract_strided_slice %65 {offsets = [0, 26], sizes = [16, 2], strides = [1, 1]} : vector<16x128xf32> to vector<16x2xf32>
    %80 = vector.extract_strided_slice %65 {offsets = [0, 28], sizes = [16, 2], strides = [1, 1]} : vector<16x128xf32> to vector<16x2xf32>
    %81 = vector.extract_strided_slice %65 {offsets = [0, 30], sizes = [16, 2], strides = [1, 1]} : vector<16x128xf32> to vector<16x2xf32>
    %82 = vector.extract_strided_slice %65 {offsets = [0, 32], sizes = [16, 2], strides = [1, 1]} : vector<16x128xf32> to vector<16x2xf32>
    %83 = vector.extract_strided_slice %65 {offsets = [0, 34], sizes = [16, 2], strides = [1, 1]} : vector<16x128xf32> to vector<16x2xf32>
    %84 = vector.extract_strided_slice %65 {offsets = [0, 36], sizes = [16, 2], strides = [1, 1]} : vector<16x128xf32> to vector<16x2xf32>
    %85 = vector.extract_strided_slice %65 {offsets = [0, 38], sizes = [16, 2], strides = [1, 1]} : vector<16x128xf32> to vector<16x2xf32>
    %86 = vector.extract_strided_slice %65 {offsets = [0, 40], sizes = [16, 2], strides = [1, 1]} : vector<16x128xf32> to vector<16x2xf32>
    %87 = vector.extract_strided_slice %65 {offsets = [0, 42], sizes = [16, 2], strides = [1, 1]} : vector<16x128xf32> to vector<16x2xf32>
    %88 = vector.extract_strided_slice %65 {offsets = [0, 44], sizes = [16, 2], strides = [1, 1]} : vector<16x128xf32> to vector<16x2xf32>
    %89 = vector.extract_strided_slice %65 {offsets = [0, 46], sizes = [16, 2], strides = [1, 1]} : vector<16x128xf32> to vector<16x2xf32>
    %90 = vector.extract_strided_slice %65 {offsets = [0, 48], sizes = [16, 2], strides = [1, 1]} : vector<16x128xf32> to vector<16x2xf32>
    %cst_18 = arith.constant 0.000000e+00 : f32
    %91 = vector.broadcast %cst_18 : f32 to vector<112x2xf32>
    %92 = tpu.concatenate %66, %67, %68, %69, %70, %71, %72, %73, %74, %75, %76, %77, %78, %79, %80, %81 in 0 : vector<16x2xf32>, vector<16x2xf32>, vector<16x2xf32>, vector<16x2xf32>, vector<16x2xf32>, vector<16x2xf32>, vector<16x2xf32>, vector<16x2xf32>, vector<16x2xf32>, vector<16x2xf32>, vector<16x2xf32>, vector<16x2xf32>, vector<16x2xf32>, vector<16x2xf32>, vector<16x2xf32>, vector<16x2xf32> -> vector<256x2xf32>
    %93 = tpu.concatenate %82, %83, %84, %85, %86, %87, %88, %89, %90, %91 in 0 : vector<16x2xf32>, vector<16x2xf32>, vector<16x2xf32>, vector<16x2xf32>, vector<16x2xf32>, vector<16x2xf32>, vector<16x2xf32>, vector<16x2xf32>, vector<16x2xf32>, vector<112x2xf32> -> vector<256x2xf32>
    %94 = tpu.concatenate %92, %93 in 0 : vector<256x2xf32>, vector<256x2xf32> -> vector<512x2xf32>
    %95 = arith.truncf %94 : vector<512x2xf32> to vector<512x2xbf16>
    %c0_19 = arith.constant 0 : index
    %c0_20 = arith.constant 0 : index
    %96 = vector.load %arg6[%c0_19, %c0_20] : memref<128x512xbf16, #tpu.memory_space<vmem>>, vector<128x512xbf16>
    %cst_21 = arith.constant dense<0.000000e+00> : vector<128x2xf32>
    %97 = tpu.matmul %96, %95, %cst_21 {dimension_numbers = #tpu.dot_dimension_numbers<[1], [0], [0], [1], [0, 0, 1, 1], [], []>} : vector<128x512xbf16>, vector<512x2xbf16>, vector<128x2xf32> -> vector<128x2xf32>
    %c0_22 = arith.constant 0 : index
    %c0_23 = arith.constant 0 : index
    %98 = vector.load %arg7[%c0_22, %c0_23] : memref<128x1xf32, #tpu.memory_space<vmem>>, vector<128x1xf32>
    %99 = vector.broadcast %98 : vector<128x1xf32> to vector<128x2xf32>
    %100 = arith.addf %97, %99 : vector<128x2xf32>
    %cst_24 = arith.constant 0.000000e+00 : f32
    %101 = vector.broadcast %cst_24 : f32 to vector<128x2xf32>
    %102 = arith.maximumf %100, %101 : vector<128x2xf32>
    %103 = arith.truncf %102 : vector<128x2xf32> to vector<128x2xbf16>
    %c0_25 = arith.constant 0 : index
    %c0_26 = arith.constant 0 : index
    %104 = vector.load %arg8[%c0_25, %c0_26] : memref<128x128xbf16, #tpu.memory_space<vmem>>, vector<128x128xbf16>
    %cst_27 = arith.constant dense<0.000000e+00> : vector<128x2xf32>
    %105 = tpu.matmul %104, %103, %cst_27 {dimension_numbers = #tpu.dot_dimension_numbers<[1], [0], [0], [1], [0, 0, 1, 1], [], []>} : vector<128x128xbf16>, vector<128x2xbf16>, vector<128x2xf32> -> vector<128x2xf32>
    %c0_28 = arith.constant 0 : index
    %c0_29 = arith.constant 0 : index
    %106 = vector.load %arg9[%c0_28, %c0_29] : memref<128x1xf32, #tpu.memory_space<vmem>>, vector<128x1xf32>
    %107 = vector.broadcast %106 : vector<128x1xf32> to vector<128x2xf32>
    %108 = arith.addf %105, %107 : vector<128x2xf32>
    %cst_30 = arith.constant 0.000000e+00 : f32
    %109 = vector.broadcast %cst_30 : f32 to vector<128x2xf32>
    %110 = arith.maximumf %108, %109 : vector<128x2xf32>
    %111 = arith.truncf %110 : vector<128x2xf32> to vector<128x2xbf16>
    %c0_31 = arith.constant 0 : index
    %c0_32 = arith.constant 0 : index
    %112 = vector.load %arg10[%c0_31, %c0_32] : memref<16x128xbf16, #tpu.memory_space<vmem>>, vector<16x128xbf16>
    %cst_33 = arith.constant dense<0.000000e+00> : vector<16x2xf32>
    %113 = tpu.matmul %112, %111, %cst_33 {dimension_numbers = #tpu.dot_dimension_numbers<[1], [0], [0], [1], [0, 0, 1, 1], [], []>} : vector<16x128xbf16>, vector<128x2xbf16>, vector<16x2xf32> -> vector<16x2xf32>
    %c0_34 = arith.constant 0 : index
    %c0_35 = arith.constant 0 : index
    %114 = vector.load %arg11[%c0_34, %c0_35] : memref<16x1xf32, #tpu.memory_space<vmem>>, vector<16x1xf32>
    %115 = vector.broadcast %114 : vector<16x1xf32> to vector<16x2xf32>
    %116 = arith.addf %113, %115 : vector<16x2xf32>
    %c0_36 = arith.constant 0 : index
    %c0_37 = arith.constant 0 : index
    %117 = vector.load %arg12[%c0_36, %c0_37] : memref<16x2xf32, #tpu.memory_space<vmem>>, vector<16x2xf32>
    tpu.vector_store %arg12[%c0_36, %c0_37], %116 {strides = array<i32>} : memref<16x2xf32, #tpu.memory_space<vmem>>, vector<16x2xf32>,
    return
  }
}

</mosaic_0001>

<llo_original>
// kernel: classical_net_conv_forward.1
$region0: #{classical_net_conv_forward.1}
  #allocation0 [shape = 'u32[]', space=smem, size = 0x4, offset = 0x4, fixed_abs, tag = 'smem constant byte address 0x4 - core index']
  #allocation1 [shape = 'u32[72,128]{1,0:T(1,128)}', space=vmem, size = 0x9000, scoped, tag = 'internal scratch']
  %s0 = inlined_call_operand.vmem [shape: bf16[128,2048], index: 0, kind: input, shape index: {}]
  %s1 = inlined_call_operand.vmem [shape: bf16[8,128], index: 1, kind: input, shape index: {}]
  %s2 = inlined_call_operand.vmem [shape: f32[8,1], index: 2, kind: input, shape index: {}]
  %s3 = inlined_call_operand.vmem [shape: bf16[16,256], index: 3, kind: input, shape index: {}]
  %s4 = inlined_call_operand.vmem [shape: f32[16,1], index: 4, kind: input, shape index: {}]
  %s5 = inlined_call_operand.vmem [shape: bf16[512,128], index: 5, kind: input, shape index: {}]
  %s6 = inlined_call_operand.vmem [shape: bf16[128,512], index: 6, kind: input, shape index: {}]
  %s7 = inlined_call_operand.vmem [shape: f32[128,1], index: 7, kind: input, shape index: {}]
  %s8 = inlined_call_operand.vmem [shape: bf16[128,128], index: 8, kind: input, shape index: {}]
  %s9 = inlined_call_operand.vmem [shape: f32[128,1], index: 9, kind: input, shape index: {}]
  %s10 = inlined_call_operand.vmem [shape: bf16[16,128], index: 10, kind: input, shape index: {}]
  %s11 = inlined_call_operand.vmem [shape: f32[16,1], index: 11, kind: input, shape index: {}]
  %s12 = inlined_call_operand.vmem [shape: f32[16,2], index: 12, kind: output, shape index: {}]
  %s13 = sld [smem:[#allocation0]]
  $region58: #{classical_net_conv_forward.1} parent=0
    _
  %s15 = ssub.s32 1, %s13
  %s16 = scalar_select 0, %s15, %s13
  // Predicated region
  $region2: #{classical_net_conv_forward.1} parent=0 // pred_check
    _
  $region3: #{classical_net_conv_forward.1} parent=0 // pred_check_branch
    %18 = sbr.rel (0) target = $region5
  $region4: #{classical_net_conv_forward.1} parent=0 // pred_region
    _
  $region5: #{classical_net_conv_forward.1} parent=0 // pred_fallthru
    _
  // Predicated region
  $region6: #{classical_net_conv_forward.1} parent=0 // pred_check
    _
  $region7: #{classical_net_conv_forward.1} parent=0 // pred_check_branch
    %20 = sbr.rel (0) target = $region9
  $region8: #{classical_net_conv_forward.1} parent=0 // pred_region
    _
  $region9: #{classical_net_conv_forward.1} parent=0 // pred_fallthru
    _
  // Predicated region
  $region10: #{classical_net_conv_forward.1} parent=0 // pred_check
    _
  $region11: #{classical_net_conv_forward.1} parent=0 // pred_check_branch
    %22 = sbr.rel (0) target = $region13
  $region12: #{classical_net_conv_forward.1} parent=0 // pred_region
    _
  $region13: #{classical_net_conv_forward.1} parent=0 // pred_fallthru
    _
  // Predicated region
  $region14: #{classical_net_conv_forward.1} parent=0 // pred_check
    _
  $region15: #{classical_net_conv_forward.1} parent=0 // pred_check_branch
    %24 = sbr.rel (0) target = $region17
  $region16: #{classical_net_conv_forward.1} parent=0 // pred_region
    _
  $region17: #{classical_net_conv_forward.1} parent=0 // pred_fallthru
    _
  // Predicated region
  $region18: #{classical_net_conv_forward.1} parent=0 // pred_check
    _
  $region19: #{classical_net_conv_forward.1} parent=0 // pred_check_branch
    %26 = sbr.rel (0) target = $region21
  $region20: #{classical_net_conv_forward.1} parent=0 // pred_region
    _
  $region21: #{classical_net_conv_forward.1} parent=0 // pred_fallthru
    _
  // Predicated region
  $region22: #{classical_net_conv_forward.1} parent=0 // pred_check
    _
  $region23: #{classical_net_conv_forward.1} parent=0 // pred_check_branch
    %28 = sbr.rel (0) target = $region25
  $region24: #{classical_net_conv_forward.1} parent=0 // pred_region
    _
  $region25: #{classical_net_conv_forward.1} parent=0 // pred_fallthru
    _
  // Predicated region
  $region26: #{classical_net_conv_forward.1} parent=0 // pred_check
    _
  $region27: #{classical_net_conv_forward.1} parent=0 // pred_check_branch
    %30 = sbr.rel (0) target = $region29
  $region28: #{classical_net_conv_forward.1} parent=0 // pred_region
    _
  $region29: #{classical_net_conv_forward.1} parent=0 // pred_fallthru
    _
  // Predicated region
  $region30: #{classical_net_conv_forward.1} parent=0 // pred_check
    _
  $region31: #{classical_net_conv_forward.1} parent=0 // pred_check_branch
    %32 = sbr.rel (0) target = $region33
  $region32: #{classical_net_conv_forward.1} parent=0 // pred_region
    _
  $region33: #{classical_net_conv_forward.1} parent=0 // pred_fallthru
    _
  // Predicated region
  $region34: #{classical_net_conv_forward.1} parent=0 // pred_check
    _
  $region35: #{classical_net_conv_forward.1} parent=0 // pred_check_branch
    %34 = sbr.rel (0) target = $region37
  $region36: #{classical_net_conv_forward.1} parent=0 // pred_region
    _
  $region37: #{classical_net_conv_forward.1} parent=0 // pred_fallthru
    _
  // Predicated region
  $region38: #{classical_net_conv_forward.1} parent=0 // pred_check
    _
  $region39: #{classical_net_conv_forward.1} parent=0 // pred_check_branch
    %36 = sbr.rel (0) target = $region41
  $region40: #{classical_net_conv_forward.1} parent=0 // pred_region
    _
  $region41: #{classical_net_conv_forward.1} parent=0 // pred_fallthru
    _
  // Predicated region
  $region42: #{classical_net_conv_forward.1} parent=0 // pred_check
    _
  $region43: #{classical_net_conv_forward.1} parent=0 // pred_check_branch
    %38 = sbr.rel (0) target = $region45
  $region44: #{classical_net_conv_forward.1} parent=0 // pred_region
    _
  $region45: #{classical_net_conv_forward.1} parent=0 // pred_fallthru
    _
  // Predicated region
  $region46: #{classical_net_conv_forward.1} parent=0 // pred_check
    _
  $region47: #{classical_net_conv_forward.1} parent=0 // pred_check_branch
    %40 = sbr.rel (0) target = $region49
  $region48: #{classical_net_conv_forward.1} parent=0 // pred_region
    _
  $region49: #{classical_net_conv_forward.1} parent=0 // pred_fallthru
    _
  %v41 = vld [vmem:[%s1] sm:$0xf]
  %v42 = vld [vmem:[%s0] sm:$0xff]
  %v43 = vld [vmem:[%s0 + $0x8] sm:$0xff]
  %v44 = vld [vmem:[%s0 + $0x10] sm:$0xff]
  %v45 = vld [vmem:[%s0 + $0x18] sm:$0xff]
  %v46 = vld [vmem:[%s0 + $0x20] sm:$0xff]
  %v47 = vld [vmem:[%s0 + $0x28] sm:$0xff]
  %v48 = vld [vmem:[%s0 + $0x30] sm:$0xff]
  %v49 = vld [vmem:[%s0 + $0x38] sm:$0xff]
  %v50 = vld [vmem:[%s0 + $0x40] sm:$0xff]
  %v51 = vld [vmem:[%s0 + $0x48] sm:$0xff]
  %v52 = vld [vmem:[%s0 + $0x50] sm:$0xff]
  %v53 = vld [vmem:[%s0 + $0x58] sm:$0xff]
  %v54 = vld [vmem:[%s0 + $0x60] sm:$0xff]
  %v55 = vld [vmem:[%s0 + $0x68] sm:$0xff]
  %v56 = vld [vmem:[%s0 + $0x70] sm:$0xff]
  %v57 = vld [vmem:[%s0 + $0x78] sm:$0xff]
  %v58 = vld [vmem:[%s0 + $0x80] sm:$0xff]
  %v59 = vld [vmem:[%s0 + $0x88] sm:$0xff]
  %v60 = vld [vmem:[%s0 + $0x90] sm:$0xff]
  %v61 = vld [vmem:[%s0 + $0x98] sm:$0xff]
  %v62 = vld [vmem:[%s0 + $0xa0] sm:$0xff]
  %v63 = vld [vmem:[%s0 + $0xa8] sm:$0xff]
  %v64 = vld [vmem:[%s0 + $0xb0] sm:$0xff]
  %v65 = vld [vmem:[%s0 + $0xb8] sm:$0xff]
  %v66 = vld [vmem:[%s0 + $0xc0] sm:$0xff]
  %v67 = vld [vmem:[%s0 + $0xc8] sm:$0xff]
  %v68 = vld [vmem:[%s0 + $0xd0] sm:$0xff]
  %v69 = vld [vmem:[%s0 + $0xd8] sm:$0xff]
  %v70 = vld [vmem:[%s0 + $0xe0] sm:$0xff]
  %v71 = vld [vmem:[%s0 + $0xe8] sm:$0xff]
  %v72 = vld [vmem:[%s0 + $0xf0] sm:$0xff]
  %v73 = vld [vmem:[%s0 + $0xf8] sm:$0xff]
  %v74 = vld [vmem:[%s0 + $0x100] sm:$0xff]
  %v75 = vld [vmem:[%s0 + $0x108] sm:$0xff]
  %v76 = vld [vmem:[%s0 + $0x110] sm:$0xff]
  %v77 = vld [vmem:[%s0 + $0x118] sm:$0xff]
  %v78 = vld [vmem:[%s0 + $0x120] sm:$0xff]
  %v79 = vld [vmem:[%s0 + $0x128] sm:$0xff]
  %v80 = vld [vmem:[%s0 + $0x130] sm:$0xff]
  %v81 = vld [vmem:[%s0 + $0x138] sm:$0xff]
  %v82 = vld [vmem:[%s0 + $0x140] sm:$0xff]
  %v83 = vld [vmem:[%s0 + $0x148] sm:$0xff]
  %v84 = vld [vmem:[%s0 + $0x150] sm:$0xff]
  %v85 = vld [vmem:[%s0 + $0x158] sm:$0xff]
  %v86 = vld [vmem:[%s0 + $0x160] sm:$0xff]
  %v87 = vld [vmem:[%s0 + $0x168] sm:$0xff]
  %v88 = vld [vmem:[%s0 + $0x170] sm:$0xff]
  %v89 = vld [vmem:[%s0 + $0x178] sm:$0xff]
  %v90 = vld [vmem:[%s0 + $0x180] sm:$0xff]
  %v91 = vld [vmem:[%s0 + $0x188] sm:$0xff]
  %v92 = vld [vmem:[%s0 + $0x190] sm:$0xff]
  %v93 = vld [vmem:[%s0 + $0x198] sm:$0xff]
  %v94 = vld [vmem:[%s0 + $0x1a0] sm:$0xff]
  %v95 = vld [vmem:[%s0 + $0x1a8] sm:$0xff]
  %v96 = vld [vmem:[%s0 + $0x1b0] sm:$0xff]
  %v97 = vld [vmem:[%s0 + $0x1b8] sm:$0xff]
  %v98 = vld [vmem:[%s0 + $0x1c0] sm:$0xff]
  %v99 = vld [vmem:[%s0 + $0x1c8] sm:$0xff]
  %v100 = vld [vmem:[%s0 + $0x1d0] sm:$0xff]
  %v101 = vld [vmem:[%s0 + $0x1d8] sm:$0xff]
  %v102 = vld [vmem:[%s0 + $0x1e0] sm:$0xff]
  %v103 = vld [vmem:[%s0 + $0x1e8] sm:$0xff]
  %v104 = vld [vmem:[%s0 + $0x1f0] sm:$0xff]
  %v105 = vld [vmem:[%s0 + $0x1f8] sm:$0xff]
  %v106 = vld [vmem:[%s0 + $0x200] sm:$0xff]
  %v107 = vld [vmem:[%s0 + $0x208] sm:$0xff]
  %v108 = vld [vmem:[%s0 + $0x210] sm:$0xff]
  %v109 = vld [vmem:[%s0 + $0x218] sm:$0xff]
  %v110 = vld [vmem:[%s0 + $0x220] sm:$0xff]
  %v111 = vld [vmem:[%s0 + $0x228] sm:$0xff]
  %v112 = vld [vmem:[%s0 + $0x230] sm:$0xff]
  %v113 = vld [vmem:[%s0 + $0x238] sm:$0xff]
  %v114 = vld [vmem:[%s0 + $0x240] sm:$0xff]
  %v115 = vld [vmem:[%s0 + $0x248] sm:$0xff]
  %v116 = vld [vmem:[%s0 + $0x250] sm:$0xff]
  %v117 = vld [vmem:[%s0 + $0x258] sm:$0xff]
  %v118 = vld [vmem:[%s0 + $0x260] sm:$0xff]
  %v119 = vld [vmem:[%s0 + $0x268] sm:$0xff]
  %v120 = vld [vmem:[%s0 + $0x270] sm:$0xff]
  %v121 = vld [vmem:[%s0 + $0x278] sm:$0xff]
  %v122 = vld [vmem:[%s0 + $0x280] sm:$0xff]
  %v123 = vld [vmem:[%s0 + $0x288] sm:$0xff]
  %v124 = vld [vmem:[%s0 + $0x290] sm:$0xff]
  %v125 = vld [vmem:[%s0 + $0x298] sm:$0xff]
  %v126 = vld [vmem:[%s0 + $0x2a0] sm:$0xff]
  %v127 = vld [vmem:[%s0 + $0x2a8] sm:$0xff]
  %v128 = vld [vmem:[%s0 + $0x2b0] sm:$0xff]
  %v129 = vld [vmem:[%s0 + $0x2b8] sm:$0xff]
  %v130 = vld [vmem:[%s0 + $0x2c0] sm:$0xff]
  %v131 = vld [vmem:[%s0 + $0x2c8] sm:$0xff]
  %v132 = vld [vmem:[%s0 + $0x2d0] sm:$0xff]
  %v133 = vld [vmem:[%s0 + $0x2d8] sm:$0xff]
  %v134 = vld [vmem:[%s0 + $0x2e0] sm:$0xff]
  %v135 = vld [vmem:[%s0 + $0x2e8] sm:$0xff]
  %v136 = vld [vmem:[%s0 + $0x2f0] sm:$0xff]
  %v137 = vld [vmem:[%s0 + $0x2f8] sm:$0xff]
  %v138 = vld [vmem:[%s0 + $0x300] sm:$0xff]
  %v139 = vld [vmem:[%s0 + $0x308] sm:$0xff]
  %v140 = vld [vmem:[%s0 + $0x310] sm:$0xff]
  %v141 = vld [vmem:[%s0 + $0x318] sm:$0xff]
  %v142 = vld [vmem:[%s0 + $0x320] sm:$0xff]
  %v143 = vld [vmem:[%s0 + $0x328] sm:$0xff]
  %v144 = vld [vmem:[%s0 + $0x330] sm:$0xff]
  %v145 = vld [vmem:[%s0 + $0x338] sm:$0xff]
  %v146 = vld [vmem:[%s0 + $0x340] sm:$0xff]
  %v147 = vld [vmem:[%s0 + $0x348] sm:$0xff]
  %v148 = vld [vmem:[%s0 + $0x350] sm:$0xff]
  %v149 = vld [vmem:[%s0 + $0x358] sm:$0xff]
  %v150 = vld [vmem:[%s0 + $0x360] sm:$0xff]
  %v151 = vld [vmem:[%s0 + $0x368] sm:$0xff]
  %v152 = vld [vmem:[%s0 + $0x370] sm:$0xff]
  %v153 = vld [vmem:[%s0 + $0x378] sm:$0xff]
  %v154 = vld [vmem:[%s0 + $0x380] sm:$0xff]
  %v155 = vld [vmem:[%s0 + $0x388] sm:$0xff]
  %v156 = vld [vmem:[%s0 + $0x390] sm:$0xff]
  %v157 = vld [vmem:[%s0 + $0x398] sm:$0xff]
  %v158 = vld [vmem:[%s0 + $0x3a0] sm:$0xff]
  %v159 = vld [vmem:[%s0 + $0x3a8] sm:$0xff]
  %v160 = vld [vmem:[%s0 + $0x3b0] sm:$0xff]
  %v161 = vld [vmem:[%s0 + $0x3b8] sm:$0xff]
  %v162 = vld [vmem:[%s0 + $0x3c0] sm:$0xff]
  %v163 = vld [vmem:[%s0 + $0x3c8] sm:$0xff]
  %v164 = vld [vmem:[%s0 + $0x3d0] sm:$0xff]
  %v165 = vld [vmem:[%s0 + $0x3d8] sm:$0xff]
  %v166 = vld [vmem:[%s0 + $0x3e0] sm:$0xff]
  %v167 = vld [vmem:[%s0 + $0x3e8] sm:$0xff]
  %v168 = vld [vmem:[%s0 + $0x3f0] sm:$0xff]
  %v169 = vld [vmem:[%s0 + $0x3f8] sm:$0xff]
  %v298 = vunpack.c.l.b16 %v42
  %v299 = vunpack.c.h.b16 %v42
  %v300 = vunpack.c.l.b16 %v43
  %v301 = vunpack.c.h.b16 %v43
  %v302 = vunpack.c.l.b16 %v44
  %v303 = vunpack.c.h.b16 %v44
  %v304 = vunpack.c.l.b16 %v45
  %v305 = vunpack.c.h.b16 %v45
  %v306 = vunpack.c.l.b16 %v46
  %v307 = vunpack.c.h.b16 %v46
  %v308 = vunpack.c.l.b16 %v47
  %v309 = vunpack.c.h.b16 %v47
  %v310 = vunpack.c.l.b16 %v48
  %v311 = vunpack.c.h.b16 %v48
  %v312 = vunpack.c.l.b16 %v49
  %v313 = vunpack.c.h.b16 %v49
  %v314 = vunpack.c.l.b16 %v50
  %v315 = vunpack.c.h.b16 %v50
  %v316 = vunpack.c.l.b16 %v51
  %v317 = vunpack.c.h.b16 %v51
  %v318 = vunpack.c.l.b16 %v52
  %v319 = vunpack.c.h.b16 %v52
  %v320 = vunpack.c.l.b16 %v53
  %v321 = vunpack.c.h.b16 %v53
  %v322 = vunpack.c.l.b16 %v54
  %v323 = vunpack.c.h.b16 %v54
  %v324 = vunpack.c.l.b16 %v55
  %v325 = vunpack.c.h.b16 %v55
  %v326 = vunpack.c.l.b16 %v56
  %v327 = vunpack.c.h.b16 %v56
  %v328 = vunpack.c.l.b16 %v57
  %v329 = vunpack.c.h.b16 %v57
  %v330 = vunpack.c.l.b16 %v58
  %v331 = vunpack.c.h.b16 %v58
  %v332 = vunpack.c.l.b16 %v59
  %v333 = vunpack.c.h.b16 %v59
  %v334 = vunpack.c.l.b16 %v60
  %v335 = vunpack.c.h.b16 %v60
  %v336 = vunpack.c.l.b16 %v61
  %v337 = vunpack.c.h.b16 %v61
  %v338 = vunpack.c.l.b16 %v62
  %v339 = vunpack.c.h.b16 %v62
  %v340 = vunpack.c.l.b16 %v63
  %v341 = vunpack.c.h.b16 %v63
  %v342 = vunpack.c.l.b16 %v64
  %v343 = vunpack.c.h.b16 %v64
  %v344 = vunpack.c.l.b16 %v65
  %v345 = vunpack.c.h.b16 %v65
  %v346 = vunpack.c.l.b16 %v66
  %v347 = vunpack.c.h.b16 %v66
  %v348 = vunpack.c.l.b16 %v67
  %v349 = vunpack.c.h.b16 %v67
  %v350 = vunpack.c.l.b16 %v68
  %v351 = vunpack.c.h.b16 %v68
  %v352 = vunpack.c.l.b16 %v69
  %v353 = vunpack.c.h.b16 %v69
  %v354 = vunpack.c.l.b16 %v70
  %v355 = vunpack.c.h.b16 %v70
  %v356 = vunpack.c.l.b16 %v71
  %v357 = vunpack.c.h.b16 %v71
  %v358 = vunpack.c.l.b16 %v72
  %v359 = vunpack.c.h.b16 %v72
  %v360 = vunpack.c.l.b16 %v73
  %v361 = vunpack.c.h.b16 %v73
  %v362 = vunpack.c.l.b16 %v74
  %v363 = vunpack.c.h.b16 %v74
  %v364 = vunpack.c.l.b16 %v75
  %v365 = vunpack.c.h.b16 %v75
  %v366 = vunpack.c.l.b16 %v76
  %v367 = vunpack.c.h.b16 %v76
  %v368 = vunpack.c.l.b16 %v77
  %v369 = vunpack.c.h.b16 %v77
  %v370 = vunpack.c.l.b16 %v78
  %v371 = vunpack.c.h.b16 %v78
  %v372 = vunpack.c.l.b16 %v79
  %v373 = vunpack.c.h.b16 %v79
  %v374 = vunpack.c.l.b16 %v80
  %v375 = vunpack.c.h.b16 %v80
  %v376 = vunpack.c.l.b16 %v81
  %v377 = vunpack.c.h.b16 %v81
  %v378 = vunpack.c.l.b16 %v82
  %v379 = vunpack.c.h.b16 %v82
  %v380 = vunpack.c.l.b16 %v83
  %v381 = vunpack.c.h.b16 %v83
  %v382 = vunpack.c.l.b16 %v84
  %v383 = vunpack.c.h.b16 %v84
  %v384 = vunpack.c.l.b16 %v85
  %v385 = vunpack.c.h.b16 %v85
  %v386 = vunpack.c.l.b16 %v86
  %v387 = vunpack.c.h.b16 %v86
  %v388 = vunpack.c.l.b16 %v87
  %v389 = vunpack.c.h.b16 %v87
  %v390 = vunpack.c.l.b16 %v88
  %v391 = vunpack.c.h.b16 %v88
  %v392 = vunpack.c.l.b16 %v89
  %v393 = vunpack.c.h.b16 %v89
  %v394 = vunpack.c.l.b16 %v90
  %v395 = vunpack.c.h.b16 %v90
  %v396 = vunpack.c.l.b16 %v91
  %v397 = vunpack.c.h.b16 %v91
  %v398 = vunpack.c.l.b16 %v92
  %v399 = vunpack.c.h.b16 %v92
  %v400 = vunpack.c.l.b16 %v93
  %v401 = vunpack.c.h.b16 %v93
  %v402 = vunpack.c.l.b16 %v94
  %v403 = vunpack.c.h.b16 %v94
  %v404 = vunpack.c.l.b16 %v95
  %v405 = vunpack.c.h.b16 %v95
  %v406 = vunpack.c.l.b16 %v96
  %v407 = vunpack.c.h.b16 %v96
  %v408 = vunpack.c.l.b16 %v97
  %v409 = vunpack.c.h.b16 %v97
  %v410 = vunpack.c.l.b16 %v98
  %v411 = vunpack.c.h.b16 %v98
  %v412 = vunpack.c.l.b16 %v99
  %v413 = vunpack.c.h.b16 %v99
  %v414 = vunpack.c.l.b16 %v100
  %v415 = vunpack.c.h.b16 %v100
  %v416 = vunpack.c.l.b16 %v101
  %v417 = vunpack.c.h.b16 %v101
  %v418 = vunpack.c.l.b16 %v102
  %v419 = vunpack.c.h.b16 %v102
  %v420 = vunpack.c.l.b16 %v103
  %v421 = vunpack.c.h.b16 %v103
  %v422 = vunpack.c.l.b16 %v104
  %v423 = vunpack.c.h.b16 %v104
  %v424 = vunpack.c.l.b16 %v105
  %v425 = vunpack.c.h.b16 %v105
  %v426 = vunpack.c.l.b16 %v106
  %v427 = vunpack.c.h.b16 %v106
  %v428 = vunpack.c.l.b16 %v107
  %v429 = vunpack.c.h.b16 %v107
  %v430 = vunpack.c.l.b16 %v108
  %v431 = vunpack.c.h.b16 %v108
  %v432 = vunpack.c.l.b16 %v109
  %v433 = vunpack.c.h.b16 %v109
  %v434 = vunpack.c.l.b16 %v110
  %v435 = vunpack.c.h.b16 %v110
  %v436 = vunpack.c.l.b16 %v111
  %v437 = vunpack.c.h.b16 %v111
  %v438 = vunpack.c.l.b16 %v112
  %v439 = vunpack.c.h.b16 %v112
  %v440 = vunpack.c.l.b16 %v113
  %v441 = vunpack.c.h.b16 %v113
  %v442 = vunpack.c.l.b16 %v114
  %v443 = vunpack.c.h.b16 %v114
  %v444 = vunpack.c.l.b16 %v115
  %v445 = vunpack.c.h.b16 %v115
  %v446 = vunpack.c.l.b16 %v116
  %v447 = vunpack.c.h.b16 %v116
  %v448 = vunpack.c.l.b16 %v117
  %v449 = vunpack.c.h.b16 %v117
  %v450 = vunpack.c.l.b16 %v118
  %v451 = vunpack.c.h.b16 %v118
  %v452 = vunpack.c.l.b16 %v119
  %v453 = vunpack.c.h.b16 %v119
  %v454 = vunpack.c.l.b16 %v120
  %v455 = vunpack.c.h.b16 %v120
  %v456 = vunpack.c.l.b16 %v121
  %v457 = vunpack.c.h.b16 %v121
  %v458 = vunpack.c.l.b16 %v122
  %v459 = vunpack.c.h.b16 %v122
  %v460 = vunpack.c.l.b16 %v123
  %v461 = vunpack.c.h.b16 %v123
  %v462 = vunpack.c.l.b16 %v124
  %v463 = vunpack.c.h.b16 %v124
  %v464 = vunpack.c.l.b16 %v125
  %v465 = vunpack.c.h.b16 %v125
  %v466 = vunpack.c.l.b16 %v126
  %v467 = vunpack.c.h.b16 %v126
  %v468 = vunpack.c.l.b16 %v127
  %v469 = vunpack.c.h.b16 %v127
  %v470 = vunpack.c.l.b16 %v128
  %v471 = vunpack.c.h.b16 %v128
  %v472 = vunpack.c.l.b16 %v129
  %v473 = vunpack.c.h.b16 %v129
  %v474 = vunpack.c.l.b16 %v130
  %v475 = vunpack.c.h.b16 %v130
  %v476 = vunpack.c.l.b16 %v131
  %v477 = vunpack.c.h.b16 %v131
  %v478 = vunpack.c.l.b16 %v132
  %v479 = vunpack.c.h.b16 %v132
  %v480 = vunpack.c.l.b16 %v133
  %v481 = vunpack.c.h.b16 %v133
  %v482 = vunpack.c.l.b16 %v134
  %v483 = vunpack.c.h.b16 %v134
  %v484 = vunpack.c.l.b16 %v135
  %v485 = vunpack.c.h.b16 %v135
  %v486 = vunpack.c.l.b16 %v136
  %v487 = vunpack.c.h.b16 %v136
  %v488 = vunpack.c.l.b16 %v137
  %v489 = vunpack.c.h.b16 %v137
  %v490 = vunpack.c.l.b16 %v138
  %v491 = vunpack.c.h.b16 %v138
  %v492 = vunpack.c.l.b16 %v139
  %v493 = vunpack.c.h.b16 %v139
  %v494 = vunpack.c.l.b16 %v140
  %v495 = vunpack.c.h.b16 %v140
  %v496 = vunpack.c.l.b16 %v141
  %v497 = vunpack.c.h.b16 %v141
  %v498 = vunpack.c.l.b16 %v142
  %v499 = vunpack.c.h.b16 %v142
  %v500 = vunpack.c.l.b16 %v143
  %v501 = vunpack.c.h.b16 %v143
  %v502 = vunpack.c.l.b16 %v144
  %v503 = vunpack.c.h.b16 %v144
  %v504 = vunpack.c.l.b16 %v145
  %v505 = vunpack.c.h.b16 %v145
  %v506 = vunpack.c.l.b16 %v146
  %v507 = vunpack.c.h.b16 %v146
  %v508 = vunpack.c.l.b16 %v147
  %v509 = vunpack.c.h.b16 %v147
  %v510 = vunpack.c.l.b16 %v148
  %v511 = vunpack.c.h.b16 %v148
  %v512 = vunpack.c.l.b16 %v149
  %v513 = vunpack.c.h.b16 %v149
  %v514 = vunpack.c.l.b16 %v150
  %v515 = vunpack.c.h.b16 %v150
  %v516 = vunpack.c.l.b16 %v151
  %v517 = vunpack.c.h.b16 %v151
  %v518 = vunpack.c.l.b16 %v152
  %v519 = vunpack.c.h.b16 %v152
  %v520 = vunpack.c.l.b16 %v153
  %v521 = vunpack.c.h.b16 %v153
  %v522 = vunpack.c.l.b16 %v154
  %v523 = vunpack.c.h.b16 %v154
  %v524 = vunpack.c.l.b16 %v155
  %v525 = vunpack.c.h.b16 %v155
  %v526 = vunpack.c.l.b16 %v156
  %v527 = vunpack.c.h.b16 %v156
  %v528 = vunpack.c.l.b16 %v157
  %v529 = vunpack.c.h.b16 %v157
  %v530 = vunpack.c.l.b16 %v158
  %v531 = vunpack.c.h.b16 %v158
  %v532 = vunpack.c.l.b16 %v159
  %v533 = vunpack.c.h.b16 %v159
  %v534 = vunpack.c.l.b16 %v160
  %v535 = vunpack.c.h.b16 %v160
  %v536 = vunpack.c.l.b16 %v161
  %v537 = vunpack.c.h.b16 %v161
  %v538 = vunpack.c.l.b16 %v162
  %v539 = vunpack.c.h.b16 %v162
  %v540 = vunpack.c.l.b16 %v163
  %v541 = vunpack.c.h.b16 %v163
  %v542 = vunpack.c.l.b16 %v164
  %v543 = vunpack.c.h.b16 %v164
  %v544 = vunpack.c.l.b16 %v165
  %v545 = vunpack.c.h.b16 %v165
  %v546 = vunpack.c.l.b16 %v166
  %v547 = vunpack.c.h.b16 %v166
  %v548 = vunpack.c.l.b16 %v167
  %v549 = vunpack.c.h.b16 %v167
  %v550 = vunpack.c.l.b16 %v168
  %v551 = vunpack.c.h.b16 %v168
  %v552 = vunpack.c.l.b16 %v169
  %v553 = vunpack.c.h.b16 %v169
  %v554 = vpack.c.b16 %v314, %v298
  %v555 = vpack.c.b16 %v315, %v299
  %v556 = vpack.c.b16 %v316, %v300
  %v557 = vpack.c.b16 %v317, %v301
  %v558 = vpack.c.b16 %v318, %v302
  %v559 = vpack.c.b16 %v319, %v303
  %v560 = vpack.c.b16 %v320, %v304
  %v561 = vpack.c.b16 %v321, %v305
  %v562 = vpack.c.b16 %v322, %v306
  %v563 = vpack.c.b16 %v323, %v307
  %v564 = vpack.c.b16 %v324, %v308
  %v565 = vpack.c.b16 %v325, %v309
  %v566 = vpack.c.b16 %v326, %v310
  %v567 = vpack.c.b16 %v327, %v311
  %v568 = vpack.c.b16 %v328, %v312
  %v569 = vpack.c.b16 %v329, %v313
  %v570 = vpack.c.b16 %v346, %v330
  %v571 = vpack.c.b16 %v347, %v331
  %v572 = vpack.c.b16 %v348, %v332
  %v573 = vpack.c.b16 %v349, %v333
  %v574 = vpack.c.b16 %v350, %v334
  %v575 = vpack.c.b16 %v351, %v335
  %v576 = vpack.c.b16 %v352, %v336
  %v577 = vpack.c.b16 %v353, %v337
  %v578 = vpack.c.b16 %v354, %v338
  %v579 = vpack.c.b16 %v355, %v339
  %v580 = vpack.c.b16 %v356, %v340
  %v581 = vpack.c.b16 %v357, %v341
  %v582 = vpack.c.b16 %v358, %v342
  %v583 = vpack.c.b16 %v359, %v343
  %v584 = vpack.c.b16 %v360, %v344
  %v585 = vpack.c.b16 %v361, %v345
  %v586 = vpack.c.b16 %v378, %v362
  %v587 = vpack.c.b16 %v379, %v363
  %v588 = vpack.c.b16 %v380, %v364
  %v589 = vpack.c.b16 %v381, %v365
  %v590 = vpack.c.b16 %v382, %v366
  %v591 = vpack.c.b16 %v383, %v367
  %v592 = vpack.c.b16 %v384, %v368
  %v593 = vpack.c.b16 %v385, %v369
  %v594 = vpack.c.b16 %v386, %v370
  %v595 = vpack.c.b16 %v387, %v371
  %v596 = vpack.c.b16 %v388, %v372
  %v597 = vpack.c.b16 %v389, %v373
  %v598 = vpack.c.b16 %v390, %v374
  %v599 = vpack.c.b16 %v391, %v375
  %v600 = vpack.c.b16 %v392, %v376
  %v601 = vpack.c.b16 %v393, %v377
  %v602 = vpack.c.b16 %v410, %v394
  %v603 = vpack.c.b16 %v411, %v395
  %v604 = vpack.c.b16 %v412, %v396
  %v605 = vpack.c.b16 %v413, %v397
  %v606 = vpack.c.b16 %v414, %v398
  %v607 = vpack.c.b16 %v415, %v399
  %v608 = vpack.c.b16 %v416, %v400
  %v609 = vpack.c.b16 %v417, %v401
  %v610 = vpack.c.b16 %v418, %v402
  %v611 = vpack.c.b16 %v419, %v403
  %v612 = vpack.c.b16 %v420, %v404
  %v613 = vpack.c.b16 %v421, %v405
  %v614 = vpack.c.b16 %v422, %v406
  %v615 = vpack.c.b16 %v423, %v407
  %v616 = vpack.c.b16 %v424, %v408
  %v617 = vpack.c.b16 %v425, %v409
  %v618 = vpack.c.b16 %v442, %v426
  %v619 = vpack.c.b16 %v443, %v427
  %v620 = vpack.c.b16 %v444, %v428
  %v621 = vpack.c.b16 %v445, %v429
  %v622 = vpack.c.b16 %v446, %v430
  %v623 = vpack.c.b16 %v447, %v431
  %v624 = vpack.c.b16 %v448, %v432
  %v625 = vpack.c.b16 %v449, %v433
  %v626 = vpack.c.b16 %v450, %v434
  %v627 = vpack.c.b16 %v451, %v435
  %v628 = vpack.c.b16 %v452, %v436
  %v629 = vpack.c.b16 %v453, %v437
  %v630 = vpack.c.b16 %v454, %v438
  %v631 = vpack.c.b16 %v455, %v439
  %v632 = vpack.c.b16 %v456, %v440
  %v633 = vpack.c.b16 %v457, %v441
  %v634 = vpack.c.b16 %v474, %v458
  %v635 = vpack.c.b16 %v475, %v459
  %v636 = vpack.c.b16 %v476, %v460
  %v637 = vpack.c.b16 %v477, %v461
  %v638 = vpack.c.b16 %v478, %v462
  %v639 = vpack.c.b16 %v479, %v463
  %v640 = vpack.c.b16 %v480, %v464
  %v641 = vpack.c.b16 %v481, %v465
  %v642 = vpack.c.b16 %v482, %v466
  %v643 = vpack.c.b16 %v483, %v467
  %v644 = vpack.c.b16 %v484, %v468
  %v645 = vpack.c.b16 %v485, %v469
  %v646 = vpack.c.b16 %v486, %v470
  %v647 = vpack.c.b16 %v487, %v471
  %v648 = vpack.c.b16 %v488, %v472
  %v649 = vpack.c.b16 %v489, %v473
  %v650 = vpack.c.b16 %v506, %v490
  %v651 = vpack.c.b16 %v507, %v491
  %v652 = vpack.c.b16 %v508, %v492
  %v653 = vpack.c.b16 %v509, %v493
  %v654 = vpack.c.b16 %v510, %v494
  %v655 = vpack.c.b16 %v511, %v495
  %v656 = vpack.c.b16 %v512, %v496
  %v657 = vpack.c.b16 %v513, %v497
  %v658 = vpack.c.b16 %v514, %v498
  %v659 = vpack.c.b16 %v515, %v499
  %v660 = vpack.c.b16 %v516, %v500
  %v661 = vpack.c.b16 %v517, %v501
  %v662 = vpack.c.b16 %v518, %v502
  %v663 = vpack.c.b16 %v519, %v503
  %v664 = vpack.c.b16 %v520, %v504
  %v665 = vpack.c.b16 %v521, %v505
  %v666 = vpack.c.b16 %v538, %v522
  %v667 = vpack.c.b16 %v539, %v523
  %v668 = vpack.c.b16 %v540, %v524
  %v669 = vpack.c.b16 %v541, %v525
  %v670 = vpack.c.b16 %v542, %v526
  %v671 = vpack.c.b16 %v543, %v527
  %v672 = vpack.c.b16 %v544, %v528
  %v673 = vpack.c.b16 %v545, %v529
  %v674 = vpack.c.b16 %v546, %v530
  %v675 = vpack.c.b16 %v547, %v531
  %v676 = vpack.c.b16 %v548, %v532
  %v677 = vpack.c.b16 %v549, %v533
  %v678 = vpack.c.b16 %v550, %v534
  %v679 = vpack.c.b16 %v551, %v535
  %v680 = vpack.c.b16 %v552, %v536
  %v681 = vpack.c.b16 %v553, %v537
  %810 = vmatpush.bf16.msra.mxu0 %v666
  %811 = vmatpush.bf16.msra.mxu0 %v650
  %812 = vmatpush.bf16.msra.mxu0 %v634
  %813 = vmatpush.bf16.msra.mxu0 %v618
  %814 = vmatpush.bf16.msra.mxu0 %v602
  %815 = vmatpush.bf16.msra.mxu0 %v586
  %816 = vmatpush.bf16.msra.mxu0 %v570
  %817 = vmatpush.bf16.msra.mxu0 %v554
  %818 = vmatmul.bf16.gmra.mxu0 %v41
  %v819 = vpop.f32.mrf.mxu0
  %v820 = vadd.f32 0.0, %v819
  %v821 = vpop.f32.mrf.mxu0
  %822 = vdwg.mxu0
  %823 = vmatpush.bf16.msra.mxu0 %v667
  %824 = vmatpush.bf16.msra.mxu0 %v651
  %825 = vmatpush.bf16.msra.mxu0 %v635
  %826 = vmatpush.bf16.msra.mxu0 %v619
  %827 = vmatpush.bf16.msra.mxu0 %v603
  %828 = vmatpush.bf16.msra.mxu0 %v587
  %829 = vmatpush.bf16.msra.mxu0 %v571
  %830 = vmatpush.bf16.msra.mxu0 %v555
  %831 = vmatmul.bf16.gmra.mxu0 %v41
  %v832 = vpop.f32.mrf.mxu0
  %v833 = vadd.f32 0.0, %v832
  %v834 = vpop.f32.mrf.mxu0
  %835 = vdwg.mxu0
  %836 = vmatpush.bf16.msra.mxu0 %v668
  %837 = vmatpush.bf16.msra.mxu0 %v652
  %838 = vmatpush.bf16.msra.mxu0 %v636
  %839 = vmatpush.bf16.msra.mxu0 %v620
  %840 = vmatpush.bf16.msra.mxu0 %v604
  %841 = vmatpush.bf16.msra.mxu0 %v588
  %842 = vmatpush.bf16.msra.mxu0 %v572
  %843 = vmatpush.bf16.msra.mxu0 %v556
  %844 = vmatmul.bf16.gmra.mxu0 %v41
  %v845 = vpop.f32.mrf.mxu0
  %v846 = vadd.f32 0.0, %v845
  %v847 = vpop.f32.mrf.mxu0
  %848 = vdwg.mxu0
  %849 = vmatpush.bf16.msra.mxu0 %v669
  %850 = vmatpush.bf16.msra.mxu0 %v653
  %851 = vmatpush.bf16.msra.mxu0 %v637
  %852 = vmatpush.bf16.msra.mxu0 %v621
  %853 = vmatpush.bf16.msra.mxu0 %v605
  %854 = vmatpush.bf16.msra.mxu0 %v589
  %855 = vmatpush.bf16.msra.mxu0 %v573
  %856 = vmatpush.bf16.msra.mxu0 %v557
  %857 = vmatmul.bf16.gmra.mxu0 %v41
  %v858 = vpop.f32.mrf.mxu0
  %v859 = vadd.f32 0.0, %v858
  %v860 = vpop.f32.mrf.mxu0
  %861 = vdwg.mxu0
  %862 = vmatpush.bf16.msra.mxu0 %v670
  %863 = vmatpush.bf16.msra.mxu0 %v654
  %864 = vmatpush.bf16.msra.mxu0 %v638
  %865 = vmatpush.bf16.msra.mxu0 %v622
  %866 = vmatpush.bf16.msra.mxu0 %v606
  %867 = vmatpush.bf16.msra.mxu0 %v590
  %868 = vmatpush.bf16.msra.mxu0 %v574
  %869 = vmatpush.bf16.msra.mxu0 %v558
  %870 = vmatmul.bf16.gmra.mxu0 %v41
  %v871 = vpop.f32.mrf.mxu0
  %v872 = vadd.f32 0.0, %v871
  %v873 = vpop.f32.mrf.mxu0
  %874 = vdwg.mxu0
  %875 = vmatpush.bf16.msra.mxu0 %v671
  %876 = vmatpush.bf16.msra.mxu0 %v655
  %877 = vmatpush.bf16.msra.mxu0 %v639
  %878 = vmatpush.bf16.msra.mxu0 %v623
  %879 = vmatpush.bf16.msra.mxu0 %v607
  %880 = vmatpush.bf16.msra.mxu0 %v591
  %881 = vmatpush.bf16.msra.mxu0 %v575
  %882 = vmatpush.bf16.msra.mxu0 %v559
  %883 = vmatmul.bf16.gmra.mxu0 %v41
  %v884 = vpop.f32.mrf.mxu0
  %v885 = vadd.f32 0.0, %v884
  %v886 = vpop.f32.mrf.mxu0
  %887 = vdwg.mxu0
  %888 = vmatpush.bf16.msra.mxu0 %v672
  %889 = vmatpush.bf16.msra.mxu0 %v656
  %890 = vmatpush.bf16.msra.mxu0 %v640
  %891 = vmatpush.bf16.msra.mxu0 %v624
  %892 = vmatpush.bf16.msra.mxu0 %v608
  %893 = vmatpush.bf16.msra.mxu0 %v592
  %894 = vmatpush.bf16.msra.mxu0 %v576
  %895 = vmatpush.bf16.msra.mxu0 %v560
  %896 = vmatmul.bf16.gmra.mxu0 %v41
  %v897 = vpop.f32.mrf.mxu0
  %v898 = vadd.f32 0.0, %v897
  %v899 = vpop.f32.mrf.mxu0
  %900 = vdwg.mxu0
  %901 = vmatpush.bf16.msra.mxu0 %v673
  %902 = vmatpush.bf16.msra.mxu0 %v657
  %903 = vmatpush.bf16.msra.mxu0 %v641
  %904 = vmatpush.bf16.msra.mxu0 %v625
  %905 = vmatpush.bf16.msra.mxu0 %v609
  %906 = vmatpush.bf16.msra.mxu0 %v593
  %907 = vmatpush.bf16.msra.mxu0 %v577
  %908 = vmatpush.bf16.msra.mxu0 %v561
  %909 = vmatmul.bf16.gmra.mxu0 %v41
  %v910 = vpop.f32.mrf.mxu0
  %v911 = vadd.f32 0.0, %v910
  %v912 = vpop.f32.mrf.mxu0
  %913 = vdwg.mxu0
  %914 = vmatpush.bf16.msra.mxu0 %v674
  %915 = vmatpush.bf16.msra.mxu0 %v658
  %916 = vmatpush.bf16.msra.mxu0 %v642
  %917 = vmatpush.bf16.msra.mxu0 %v626
  %918 = vmatpush.bf16.msra.mxu0 %v610
  %919 = vmatpush.bf16.msra.mxu0 %v594
  %920 = vmatpush.bf16.msra.mxu0 %v578
  %921 = vmatpush.bf16.msra.mxu0 %v562
  %922 = vmatmul.bf16.gmra.mxu0 %v41
  %v923 = vpop.f32.mrf.mxu0
  %v924 = vadd.f32 0.0, %v923
  %v925 = vpop.f32.mrf.mxu0
  %926 = vdwg.mxu0
  %927 = vmatpush.bf16.msra.mxu0 %v675
  %928 = vmatpush.bf16.msra.mxu0 %v659
  %929 = vmatpush.bf16.msra.mxu0 %v643
  %930 = vmatpush.bf16.msra.mxu0 %v627
  %931 = vmatpush.bf16.msra.mxu0 %v611
  %932 = vmatpush.bf16.msra.mxu0 %v595
  %933 = vmatpush.bf16.msra.mxu0 %v579
  %934 = vmatpush.bf16.msra.mxu0 %v563
  %935 = vmatmul.bf16.gmra.mxu0 %v41
  %v936 = vpop.f32.mrf.mxu0
  %v937 = vadd.f32 0.0, %v936
  %v938 = vpop.f32.mrf.mxu0
  %939 = vdwg.mxu0
  %940 = vmatpush.bf16.msra.mxu0 %v676
  %941 = vmatpush.bf16.msra.mxu0 %v660
  %942 = vmatpush.bf16.msra.mxu0 %v644
  %943 = vmatpush.bf16.msra.mxu0 %v628
  %944 = vmatpush.bf16.msra.mxu0 %v612
  %945 = vmatpush.bf16.msra.mxu0 %v596
  %946 = vmatpush.bf16.msra.mxu0 %v580
  %947 = vmatpush.bf16.msra.mxu0 %v564
  %948 = vmatmul.bf16.gmra.mxu0 %v41
  %v949 = vpop.f32.mrf.mxu0
  %v950 = vadd.f32 0.0, %v949
  %v951 = vpop.f32.mrf.mxu0
  %952 = vdwg.mxu0
  %953 = vmatpush.bf16.msra.mxu0 %v677
  %954 = vmatpush.bf16.msra.mxu0 %v661
  %955 = vmatpush.bf16.msra.mxu0 %v645
  %956 = vmatpush.bf16.msra.mxu0 %v629
  %957 = vmatpush.bf16.msra.mxu0 %v613
  %958 = vmatpush.bf16.msra.mxu0 %v597
  %959 = vmatpush.bf16.msra.mxu0 %v581
  %960 = vmatpush.bf16.msra.mxu0 %v565
  %961 = vmatmul.bf16.gmra.mxu0 %v41
  %v962 = vpop.f32.mrf.mxu0
  %v963 = vadd.f32 0.0, %v962
  %v964 = vpop.f32.mrf.mxu0
  %965 = vdwg.mxu0
  %966 = vmatpush.bf16.msra.mxu0 %v678
  %967 = vmatpush.bf16.msra.mxu0 %v662
  %968 = vmatpush.bf16.msra.mxu0 %v646
  %969 = vmatpush.bf16.msra.mxu0 %v630
  %970 = vmatpush.bf16.msra.mxu0 %v614
  %971 = vmatpush.bf16.msra.mxu0 %v598
  %972 = vmatpush.bf16.msra.mxu0 %v582
  %973 = vmatpush.bf16.msra.mxu0 %v566
  %974 = vmatmul.bf16.gmra.mxu0 %v41
  %v975 = vpop.f32.mrf.mxu0
  %v976 = vadd.f32 0.0, %v975
  %v977 = vpop.f32.mrf.mxu0
  %978 = vdwg.mxu0
  %979 = vmatpush.bf16.msra.mxu0 %v679
  %980 = vmatpush.bf16.msra.mxu0 %v663
  %981 = vmatpush.bf16.msra.mxu0 %v647
  %982 = vmatpush.bf16.msra.mxu0 %v631
  %983 = vmatpush.bf16.msra.mxu0 %v615
  %984 = vmatpush.bf16.msra.mxu0 %v599
  %985 = vmatpush.bf16.msra.mxu0 %v583
  %986 = vmatpush.bf16.msra.mxu0 %v567
  %987 = vmatmul.bf16.gmra.mxu0 %v41
  %v988 = vpop.f32.mrf.mxu0
  %v989 = vadd.f32 0.0, %v988
  %v990 = vpop.f32.mrf.mxu0
  %991 = vdwg.mxu0
  %992 = vmatpush.bf16.msra.mxu0 %v680
  %993 = vmatpush.bf16.msra.mxu0 %v664
  %994 = vmatpush.bf16.msra.mxu0 %v648
  %995 = vmatpush.bf16.msra.mxu0 %v632
  %996 = vmatpush.bf16.msra.mxu0 %v616
  %997 = vmatpush.bf16.msra.mxu0 %v600
  %998 = vmatpush.bf16.msra.mxu0 %v584
  %999 = vmatpush.bf16.msra.mxu0 %v568
  %1000 = vmatmul.bf16.gmra.mxu0 %v41
  %v1001 = vpop.f32.mrf.mxu0
  %v1002 = vadd.f32 0.0, %v1001
  %v1003 = vpop.f32.mrf.mxu0
  %1004 = vdwg.mxu0
  %1005 = vmatpush.bf16.msra.mxu0 %v681
  %1006 = vmatpush.bf16.msra.mxu0 %v665
  %1007 = vmatpush.bf16.msra.mxu0 %v649
  %1008 = vmatpush.bf16.msra.mxu0 %v633
  %1009 = vmatpush.bf16.msra.mxu0 %v617
  %1010 = vmatpush.bf16.msra.mxu0 %v601
  %1011 = vmatpush.bf16.msra.mxu0 %v585
  %1012 = vmatpush.bf16.msra.mxu0 %v569
  %1013 = vmatmul.bf16.gmra.mxu0 %v41
  %v1014 = vpop.f32.mrf.mxu0
  %v1015 = vadd.f32 0.0, %v1014
  %v1016 = vpop.f32.mrf.mxu0
  %1017 = vdwg.mxu0
  %v1018 = vmax.f32 %v820, %v872
  %v1019 = vmax.f32 %v833, %v885
  %v1020 = vmax.f32 %v846, %v898
  %v1021 = vmax.f32 %v859, %v911
  %v1022 = vmax.f32 %v1018, %v924
  %v1023 = vmax.f32 %v1019, %v937
  %v1024 = vmax.f32 %v1020, %v950
  %v1025 = vmax.f32 %v1021, %v963
  %v1026 = vmax.f32 %v1022, %v976
  %v1027 = vmax.f32 %v1023, %v989
  %v1028 = vmax.f32 %v1024, %v1002
  %v1029 = vmax.f32 %v1025, %v1015
  %v1030 = vld [vmem:[%s2] sm:$0xff]
  %1032 = vset.pattern.permute.xlu0 0
  %1033 = vperm.xlu0 %1032, %v1030
  %v1034 = vpop.permute.xlu0 %1033
  %v1036 = vadd.f32 %v1026, %v1034
  %v1037 = vadd.f32 %v1027, %v1034
  %v1038 = vadd.f32 %v1028, %v1034
  %v1039 = vadd.f32 %v1029, %v1034
  %v1040 = vmax.f32 %v1036, 0.0
  %v1041 = vmax.f32 %v1037, 0.0
  %v1042 = vmax.f32 %v1038, 0.0
  %v1043 = vmax.f32 %v1039, 0.0
  %1049 = vrot.lane.b32.xlu0 %v1040, 127
  %v1050 = vpop.permute.xlu0 %1049
  %1051 = vrot.lane.b32.xlu0 %v1041, 127
  %v1052 = vpop.permute.xlu0 %1051
  %1053 = vrot.lane.b32.xlu0 %v1042, 127
  %v1054 = vpop.permute.xlu0 %1053
  %1055 = vrot.lane.b32.xlu0 %v1043, 127
  %v1056 = vpop.permute.xlu0 %1055
  %1057 = vrot.lane.b32.xlu0 0.0, 127
  %v1058 = vpop.permute.xlu0 %1057
  %vm1059 = vcmask 1039360
  %v1060 = vsel %vm1059, %v1050, %v1052
  %v1061 = vsel %vm1059, %v1052, %v1054
  %v1062 = vsel %vm1059, %v1054, %v1056
  %v1063 = vsel %vm1059, %v1056, %v1058
  %1068 = vrot.lane.b32.xlu0 %v1040, 126
  %v1069 = vpop.permute.xlu0 %1068
  %1070 = vrot.lane.b32.xlu0 %v1041, 126
  %v1071 = vpop.permute.xlu0 %1070
  %1072 = vrot.lane.b32.xlu0 %v1042, 126
  %v1073 = vpop.permute.xlu0 %1072
  %1074 = vrot.lane.b32.xlu0 %v1043, 126
  %v1075 = vpop.permute.xlu0 %1074
  %1076 = vrot.lane.b32.xlu0 0.0, 126
  %v1077 = vpop.permute.xlu0 %1076
  %vm1078 = vcmask 1031168
  %v1079 = vsel %vm1078, %v1069, %v1071
  %v1080 = vsel %vm1078, %v1071, %v1073
  %v1081 = vsel %vm1078, %v1073, %v1075
  %v1082 = vsel %vm1078, %v1075, %v1077
  %1087 = vrot.lane.b32.xlu0 %v1040, 125
  %v1088 = vpop.permute.xlu0 %1087
  %1089 = vrot.lane.b32.xlu0 %v1041, 125
  %v1090 = vpop.permute.xlu0 %1089
  %1091 = vrot.lane.b32.xlu0 %v1042, 125
  %v1092 = vpop.permute.xlu0 %1091
  %1093 = vrot.lane.b32.xlu0 %v1043, 125
  %v1094 = vpop.permute.xlu0 %1093
  %1095 = vrot.lane.b32.xlu0 0.0, 125
  %v1096 = vpop.permute.xlu0 %1095
  %vm1097 = vcmask 1022976
  %v1098 = vsel %vm1097, %v1088, %v1090
  %v1099 = vsel %vm1097, %v1090, %v1092
  %v1100 = vsel %vm1097, %v1092, %v1094
  %v1101 = vsel %vm1097, %v1094, %v1096
  %1106 = vrot.lane.b32.xlu0 %v1040, 124
  %v1107 = vpop.permute.xlu0 %1106
  %1108 = vrot.lane.b32.xlu0 %v1041, 124
  %v1109 = vpop.permute.xlu0 %1108
  %1110 = vrot.lane.b32.xlu0 %v1042, 124
  %v1111 = vpop.permute.xlu0 %1110
  %1112 = vrot.lane.b32.xlu0 %v1043, 124
  %v1113 = vpop.permute.xlu0 %1112
  %1114 = vrot.lane.b32.xlu0 0.0, 124
  %v1115 = vpop.permute.xlu0 %1114
  %vm1116 = vcmask 1014784
  %v1117 = vsel %vm1116, %v1107, %v1109
  %v1118 = vsel %vm1116, %v1109, %v1111
  %v1119 = vsel %vm1116, %v1111, %v1113
  %v1120 = vsel %vm1116, %v1113, %v1115
  %1125 = vrot.lane.b32.xlu0 %v1040, 114
  %v1126 = vpop.permute.xlu0 %1125
  %1127 = vrot.lane.b32.xlu0 %v1041, 114
  %v1128 = vpop.permute.xlu0 %1127
  %1129 = vrot.lane.b32.xlu0 %v1042, 114
  %v1130 = vpop.permute.xlu0 %1129
  %1131 = vrot.lane.b32.xlu0 %v1043, 114
  %v1132 = vpop.permute.xlu0 %1131
  %1133 = vrot.lane.b32.xlu0 0.0, 114
  %v1134 = vpop.permute.xlu0 %1133
  %vm1135 = vcmask 932864
  %v1136 = vsel %vm1135, %v1126, %v1128
  %v1137 = vsel %vm1135, %v1128, %v1130
  %v1138 = vsel %vm1135, %v1130, %v1132
  %v1139 = vsel %vm1135, %v1132, %v1134
  %1144 = vrot.lane.b32.xlu0 %v1040, 113
  %v1145 = vpop.permute.xlu0 %1144
  %1146 = vrot.lane.b32.xlu0 %v1041, 113
  %v1147 = vpop.permute.xlu0 %1146
  %1148 = vrot.lane.b32.xlu0 %v1042, 113
  %v1149 = vpop.permute.xlu0 %1148
  %1150 = vrot.lane.b32.xlu0 %v1043, 113
  %v1151 = vpop.permute.xlu0 %1150
  %1152 = vrot.lane.b32.xlu0 0.0, 113
  %v1153 = vpop.permute.xlu0 %1152
  %vm1154 = vcmask 924672
  %v1155 = vsel %vm1154, %v1145, %v1147
  %v1156 = vsel %vm1154, %v1147, %v1149
  %v1157 = vsel %vm1154, %v1149, %v1151
  %v1158 = vsel %vm1154, %v1151, %v1153
  %1163 = vrot.lane.b32.xlu0 %v1040, 112
  %v1164 = vpop.permute.xlu0 %1163
  %1165 = vrot.lane.b32.xlu0 %v1041, 112
  %v1166 = vpop.permute.xlu0 %1165
  %1167 = vrot.lane.b32.xlu0 %v1042, 112
  %v1168 = vpop.permute.xlu0 %1167
  %1169 = vrot.lane.b32.xlu0 %v1043, 112
  %v1170 = vpop.permute.xlu0 %1169
  %1171 = vrot.lane.b32.xlu0 0.0, 112
  %v1172 = vpop.permute.xlu0 %1171
  %vm1173 = vcmask 916480
  %v1174 = vsel %vm1173, %v1164, %v1166
  %v1175 = vsel %vm1173, %v1166, %v1168
  %v1176 = vsel %vm1173, %v1168, %v1170
  %v1177 = vsel %vm1173, %v1170, %v1172
  %1182 = vrot.lane.b32.xlu0 %v1040, 111
  %v1183 = vpop.permute.xlu0 %1182
  %1184 = vrot.lane.b32.xlu0 %v1041, 111
  %v1185 = vpop.permute.xlu0 %1184
  %1186 = vrot.lane.b32.xlu0 %v1042, 111
  %v1187 = vpop.permute.xlu0 %1186
  %1188 = vrot.lane.b32.xlu0 %v1043, 111
  %v1189 = vpop.permute.xlu0 %1188
  %1190 = vrot.lane.b32.xlu0 0.0, 111
  %v1191 = vpop.permute.xlu0 %1190
  %vm1192 = vcmask 908288
  %v1193 = vsel %vm1192, %v1183, %v1185
  %v1194 = vsel %vm1192, %v1185, %v1187
  %v1195 = vsel %vm1192, %v1187, %v1189
  %v1196 = vsel %vm1192, %v1189, %v1191
  %1201 = vrot.lane.b32.xlu0 %v1040, 110
  %v1202 = vpop.permute.xlu0 %1201
  %1203 = vrot.lane.b32.xlu0 %v1041, 110
  %v1204 = vpop.permute.xlu0 %1203
  %1205 = vrot.lane.b32.xlu0 %v1042, 110
  %v1206 = vpop.permute.xlu0 %1205
  %1207 = vrot.lane.b32.xlu0 %v1043, 110
  %v1208 = vpop.permute.xlu0 %1207
  %1209 = vrot.lane.b32.xlu0 0.0, 110
  %v1210 = vpop.permute.xlu0 %1209
  %vm1211 = vcmask 900096
  %v1212 = vsel %vm1211, %v1202, %v1204
  %v1213 = vsel %vm1211, %v1204, %v1206
  %v1214 = vsel %vm1211, %v1206, %v1208
  %v1215 = vsel %vm1211, %v1208, %v1210
  %1220 = vrot.lane.b32.xlu0 %v1040, 100
  %v1221 = vpop.permute.xlu0 %1220
  %1222 = vrot.lane.b32.xlu0 %v1041, 100
  %v1223 = vpop.permute.xlu0 %1222
  %1224 = vrot.lane.b32.xlu0 %v1042, 100
  %v1225 = vpop.permute.xlu0 %1224
  %1226 = vrot.lane.b32.xlu0 %v1043, 100
  %v1227 = vpop.permute.xlu0 %1226
  %1228 = vrot.lane.b32.xlu0 0.0, 100
  %v1229 = vpop.permute.xlu0 %1228
  %vm1230 = vcmask 818176
  %v1231 = vsel %vm1230, %v1221, %v1223
  %v1232 = vsel %vm1230, %v1223, %v1225
  %v1233 = vsel %vm1230, %v1225, %v1227
  %v1234 = vsel %vm1230, %v1227, %v1229
  %1239 = vrot.lane.b32.xlu0 %v1040, 99
  %v1240 = vpop.permute.xlu0 %1239
  %1241 = vrot.lane.b32.xlu0 %v1041, 99
  %v1242 = vpop.permute.xlu0 %1241
  %1243 = vrot.lane.b32.xlu0 %v1042, 99
  %v1244 = vpop.permute.xlu0 %1243
  %1245 = vrot.lane.b32.xlu0 %v1043, 99
  %v1246 = vpop.permute.xlu0 %1245
  %1247 = vrot.lane.b32.xlu0 0.0, 99
  %v1248 = vpop.permute.xlu0 %1247
  %vm1249 = vcmask 809984
  %v1250 = vsel %vm1249, %v1240, %v1242
  %v1251 = vsel %vm1249, %v1242, %v1244
  %v1252 = vsel %vm1249, %v1244, %v1246
  %v1253 = vsel %vm1249, %v1246, %v1248
  %1258 = vrot.lane.b32.xlu0 %v1040, 98
  %v1259 = vpop.permute.xlu0 %1258
  %1260 = vrot.lane.b32.xlu0 %v1041, 98
  %v1261 = vpop.permute.xlu0 %1260
  %1262 = vrot.lane.b32.xlu0 %v1042, 98
  %v1263 = vpop.permute.xlu0 %1262
  %1264 = vrot.lane.b32.xlu0 %v1043, 98
  %v1265 = vpop.permute.xlu0 %1264
  %1266 = vrot.lane.b32.xlu0 0.0, 98
  %v1267 = vpop.permute.xlu0 %1266
  %vm1268 = vcmask 801792
  %v1269 = vsel %vm1268, %v1259, %v1261
  %v1270 = vsel %vm1268, %v1261, %v1263
  %v1271 = vsel %vm1268, %v1263, %v1265
  %v1272 = vsel %vm1268, %v1265, %v1267
  %1277 = vrot.lane.b32.xlu0 %v1040, 97
  %v1278 = vpop.permute.xlu0 %1277
  %1279 = vrot.lane.b32.xlu0 %v1041, 97
  %v1280 = vpop.permute.xlu0 %1279
  %1281 = vrot.lane.b32.xlu0 %v1042, 97
  %v1282 = vpop.permute.xlu0 %1281
  %1283 = vrot.lane.b32.xlu0 %v1043, 97
  %v1284 = vpop.permute.xlu0 %1283
  %1285 = vrot.lane.b32.xlu0 0.0, 97
  %v1286 = vpop.permute.xlu0 %1285
  %vm1287 = vcmask 793600
  %v1288 = vsel %vm1287, %v1278, %v1280
  %v1289 = vsel %vm1287, %v1280, %v1282
  %v1290 = vsel %vm1287, %v1282, %v1284
  %v1291 = vsel %vm1287, %v1284, %v1286
  %1296 = vrot.lane.b32.xlu0 %v1040, 96
  %v1297 = vpop.permute.xlu0 %1296
  %1298 = vrot.lane.b32.xlu0 %v1041, 96
  %v1299 = vpop.permute.xlu0 %1298
  %1300 = vrot.lane.b32.xlu0 %v1042, 96
  %v1301 = vpop.permute.xlu0 %1300
  %1302 = vrot.lane.b32.xlu0 %v1043, 96
  %v1303 = vpop.permute.xlu0 %1302
  %1304 = vrot.lane.b32.xlu0 0.0, 96
  %v1305 = vpop.permute.xlu0 %1304
  %vm1306 = vcmask 785408
  %v1307 = vsel %vm1306, %v1297, %v1299
  %v1308 = vsel %vm1306, %v1299, %v1301
  %v1309 = vsel %vm1306, %v1301, %v1303
  %v1310 = vsel %vm1306, %v1303, %v1305
  %1315 = vrot.lane.b32.xlu0 %v1040, 86
  %v1316 = vpop.permute.xlu0 %1315
  %1317 = vrot.lane.b32.xlu0 %v1041, 86
  %v1318 = vpop.permute.xlu0 %1317
  %1319 = vrot.lane.b32.xlu0 %v1042, 86
  %v1320 = vpop.permute.xlu0 %1319
  %1321 = vrot.lane.b32.xlu0 %v1043, 86
  %v1322 = vpop.permute.xlu0 %1321
  %1323 = vrot.lane.b32.xlu0 0.0, 86
  %v1324 = vpop.permute.xlu0 %1323
  %vm1325 = vcmask 703488
  %v1326 = vsel %vm1325, %v1316, %v1318
  %v1327 = vsel %vm1325, %v1318, %v1320
  %v1328 = vsel %vm1325, %v1320, %v1322
  %v1329 = vsel %vm1325, %v1322, %v1324
  %1334 = vrot.lane.b32.xlu0 %v1040, 115
  %v1335 = vpop.permute.xlu0 %1334
  %1336 = vrot.lane.b32.xlu0 %v1041, 115
  %v1337 = vpop.permute.xlu0 %1336
  %1338 = vrot.lane.b32.xlu0 %v1042, 115
  %v1339 = vpop.permute.xlu0 %1338
  %1340 = vrot.lane.b32.xlu0 %v1043, 115
  %v1341 = vpop.permute.xlu0 %1340
  %1342 = vrot.lane.b32.xlu0 0.0, 115
  %v1343 = vpop.permute.xlu0 %1342
  %vm1344 = vcmask 941056
  %v1345 = vsel %vm1344, %v1335, %v1337
  %v1346 = vsel %vm1344, %v1337, %v1339
  %v1347 = vsel %vm1344, %v1339, %v1341
  %v1348 = vsel %vm1344, %v1341, %v1343
  %1349 = vrot.lane.b32.xlu0 %v1040, 85
  %v1350 = vpop.permute.xlu0 %1349
  %1351 = vrot.lane.b32.xlu0 %v1041, 85
  %v1352 = vpop.permute.xlu0 %1351
  %1353 = vrot.lane.b32.xlu0 %v1042, 85
  %v1354 = vpop.permute.xlu0 %1353
  %1355 = vrot.lane.b32.xlu0 %v1043, 85
  %v1356 = vpop.permute.xlu0 %1355
  %1357 = vrot.lane.b32.xlu0 0.0, 85
  %v1358 = vpop.permute.xlu0 %1357
  %1359 = vrot.lane.b32.xlu0 %v1060, 85
  %v1360 = vpop.permute.xlu0 %1359
  %1361 = vrot.lane.b32.xlu0 %v1061, 85
  %v1362 = vpop.permute.xlu0 %1361
  %1363 = vrot.lane.b32.xlu0 %v1062, 85
  %v1364 = vpop.permute.xlu0 %1363
  %1365 = vrot.lane.b32.xlu0 %v1063, 85
  %v1366 = vpop.permute.xlu0 %1365
  %1367 = vrot.lane.b32.xlu0 %v1058, 85
  %v1368 = vpop.permute.xlu0 %1367
  %1369 = vrot.lane.b32.xlu0 %v1079, 85
  %v1370 = vpop.permute.xlu0 %1369
  %1371 = vrot.lane.b32.xlu0 %v1080, 85
  %v1372 = vpop.permute.xlu0 %1371
  %1373 = vrot.lane.b32.xlu0 %v1081, 85
  %v1374 = vpop.permute.xlu0 %1373
  %1375 = vrot.lane.b32.xlu0 %v1082, 85
  %v1376 = vpop.permute.xlu0 %1375
  %1377 = vrot.lane.b32.xlu0 %v1077, 85
  %v1378 = vpop.permute.xlu0 %1377
  %1379 = vrot.lane.b32.xlu0 %v1098, 85
  %v1380 = vpop.permute.xlu0 %1379
  %1381 = vrot.lane.b32.xlu0 %v1099, 85
  %v1382 = vpop.permute.xlu0 %1381
  %1383 = vrot.lane.b32.xlu0 %v1100, 85
  %v1384 = vpop.permute.xlu0 %1383
  %1385 = vrot.lane.b32.xlu0 %v1101, 85
  %v1386 = vpop.permute.xlu0 %1385
  %1387 = vrot.lane.b32.xlu0 %v1096, 85
  %v1388 = vpop.permute.xlu0 %1387
  %1389 = vrot.lane.b32.xlu0 %v1345, 85
  %v1390 = vpop.permute.xlu0 %1389
  %1391 = vrot.lane.b32.xlu0 %v1346, 85
  %v1392 = vpop.permute.xlu0 %1391
  %1393 = vrot.lane.b32.xlu0 %v1347, 85
  %v1394 = vpop.permute.xlu0 %1393
  %1395 = vrot.lane.b32.xlu0 %v1348, 85
  %v1396 = vpop.permute.xlu0 %1395
  %1397 = vrot.lane.b32.xlu0 %v1343, 85
  %v1398 = vpop.permute.xlu0 %1397
  %1399 = vrot.lane.b32.xlu0 %v1136, 85
  %v1400 = vpop.permute.xlu0 %1399
  %1401 = vrot.lane.b32.xlu0 %v1137, 85
  %v1402 = vpop.permute.xlu0 %1401
  %1403 = vrot.lane.b32.xlu0 %v1138, 85
  %v1404 = vpop.permute.xlu0 %1403
  %1405 = vrot.lane.b32.xlu0 %v1139, 85
  %v1406 = vpop.permute.xlu0 %1405
  %1407 = vrot.lane.b32.xlu0 %v1134, 85
  %v1408 = vpop.permute.xlu0 %1407
  %1409 = vrot.lane.b32.xlu0 %v1155, 85
  %v1410 = vpop.permute.xlu0 %1409
  %1411 = vrot.lane.b32.xlu0 %v1156, 85
  %v1412 = vpop.permute.xlu0 %1411
  %1413 = vrot.lane.b32.xlu0 %v1157, 85
  %v1414 = vpop.permute.xlu0 %1413
  %1415 = vrot.lane.b32.xlu0 %v1158, 85
  %v1416 = vpop.permute.xlu0 %1415
  %1417 = vrot.lane.b32.xlu0 %v1153, 85
  %v1418 = vpop.permute.xlu0 %1417
  %1419 = vrot.lane.b32.xlu0 %v1174, 85
  %v1420 = vpop.permute.xlu0 %1419
  %1421 = vrot.lane.b32.xlu0 %v1175, 85
  %v1422 = vpop.permute.xlu0 %1421
  %1423 = vrot.lane.b32.xlu0 %v1176, 85
  %v1424 = vpop.permute.xlu0 %1423
  %1425 = vrot.lane.b32.xlu0 %v1177, 85
  %v1426 = vpop.permute.xlu0 %1425
  %1427 = vrot.lane.b32.xlu0 %v1172, 85
  %v1428 = vpop.permute.xlu0 %1427
  %1429 = vrot.lane.b32.xlu0 %v1193, 85
  %v1430 = vpop.permute.xlu0 %1429
  %1431 = vrot.lane.b32.xlu0 %v1194, 85
  %v1432 = vpop.permute.xlu0 %1431
  %1433 = vrot.lane.b32.xlu0 %v1195, 85
  %v1434 = vpop.permute.xlu0 %1433
  %1435 = vrot.lane.b32.xlu0 %v1196, 85
  %v1436 = vpop.permute.xlu0 %1435
  %1437 = vrot.lane.b32.xlu0 %v1191, 85
  %v1438 = vpop.permute.xlu0 %1437
  %vm1439 = vcmask 695296
  %v1440 = vsel %vm1439, %v1350, %v1352
  %v1441 = vsel %vm1439, %v1352, %v1354
  %v1442 = vsel %vm1439, %v1354, %v1356
  %v1443 = vsel %vm1439, %v1356, %v1358
  %v1444 = vsel %vm1439, %v1360, %v1362
  %v1445 = vsel %vm1439, %v1362, %v1364
  %v1446 = vsel %vm1439, %v1364, %v1366
  %v1447 = vsel %vm1439, %v1366, %v1368
  %v1448 = vsel %vm1439, %v1370, %v1372
  %v1449 = vsel %vm1439, %v1372, %v1374
  %v1450 = vsel %vm1439, %v1374, %v1376
  %v1451 = vsel %vm1439, %v1376, %v1378
  %v1452 = vsel %vm1439, %v1380, %v1382
  %v1453 = vsel %vm1439, %v1382, %v1384
  %v1454 = vsel %vm1439, %v1384, %v1386
  %v1455 = vsel %vm1439, %v1386, %v1388
  %v1456 = vsel %vm1439, %v1390, %v1392
  %v1457 = vsel %vm1439, %v1392, %v1394
  %v1458 = vsel %vm1439, %v1394, %v1396
  %v1459 = vsel %vm1439, %v1396, %v1398
  %v1460 = vsel %vm1439, %v1400, %v1402
  %v1461 = vsel %vm1439, %v1402, %v1404
  %v1462 = vsel %vm1439, %v1404, %v1406
  %v1463 = vsel %vm1439, %v1406, %v1408
  %v1464 = vsel %vm1439, %v1410, %v1412
  %v1465 = vsel %vm1439, %v1412, %v1414
  %v1466 = vsel %vm1439, %v1414, %v1416
  %v1467 = vsel %vm1439, %v1416, %v1418
  %v1468 = vsel %vm1439, %v1420, %v1422
  %v1469 = vsel %vm1439, %v1422, %v1424
  %v1470 = vsel %vm1439, %v1424, %v1426
  %v1471 = vsel %vm1439, %v1426, %v1428
  %v1472 = vsel %vm1439, %v1430, %v1432
  %v1473 = vsel %vm1439, %v1432, %v1434
  %v1474 = vsel %vm1439, %v1434, %v1436
  %v1475 = vsel %vm1439, %v1436, %v1438
  %v1513 = vpack.c.bf16 %v1060, %v1040
  %v1514 = vpack.c.bf16 %v1061, %v1041
  %v1515 = vpack.c.bf16 %v1062, %v1042
  %v1516 = vpack.c.bf16 %v1063, %v1043
  %v1517 = vpack.c.bf16 %v1098, %v1079
  %v1518 = vpack.c.bf16 %v1099, %v1080
  %v1519 = vpack.c.bf16 %v1100, %v1081
  %v1520 = vpack.c.bf16 %v1101, %v1082
  %v1521 = vpack.c.bf16 %v1136, %v1117
  %v1522 = vpack.c.bf16 %v1137, %v1118
  %v1523 = vpack.c.bf16 %v1138, %v1119
  %v1524 = vpack.c.bf16 %v1139, %v1120
  %v1525 = vpack.c.bf16 %v1174, %v1155
  %v1526 = vpack.c.bf16 %v1175, %v1156
  %v1527 = vpack.c.bf16 %v1176, %v1157
  %v1528 = vpack.c.bf16 %v1177, %v1158
  %v1529 = vpack.c.bf16 %v1212, %v1193
  %v1530 = vpack.c.bf16 %v1213, %v1194
  %v1531 = vpack.c.bf16 %v1214, %v1195
  %v1532 = vpack.c.bf16 %v1215, %v1196
  %v1533 = vpack.c.bf16 %v1250, %v1231
  %v1534 = vpack.c.bf16 %v1251, %v1232
  %v1535 = vpack.c.bf16 %v1252, %v1233
  %v1536 = vpack.c.bf16 %v1253, %v1234
  %v1537 = vpack.c.bf16 %v1288, %v1269
  %v1538 = vpack.c.bf16 %v1289, %v1270
  %v1539 = vpack.c.bf16 %v1290, %v1271
  %v1540 = vpack.c.bf16 %v1291, %v1272
  %v1541 = vpack.c.bf16 %v1326, %v1307
  %v1542 = vpack.c.bf16 %v1327, %v1308
  %v1543 = vpack.c.bf16 %v1328, %v1309
  %v1544 = vpack.c.bf16 %v1329, %v1310
  %v1545 = vpack.c.bf16 %v1444, %v1440
  %v1546 = vpack.c.bf16 %v1445, %v1441
  %v1547 = vpack.c.bf16 %v1446, %v1442
  %v1548 = vpack.c.bf16 %v1447, %v1443
  %v1549 = vpack.c.bf16 %v1452, %v1448
  %v1550 = vpack.c.bf16 %v1453, %v1449
  %v1551 = vpack.c.bf16 %v1454, %v1450
  %v1552 = vpack.c.bf16 %v1455, %v1451
  %v1553 = vpack.c.bf16 %v1460, %v1456
  %v1554 = vpack.c.bf16 %v1461, %v1457
  %v1555 = vpack.c.bf16 %v1462, %v1458
  %v1556 = vpack.c.bf16 %v1463, %v1459
  %v1557 = vpack.c.bf16 %v1468, %v1464
  %v1558 = vpack.c.bf16 %v1469, %v1465
  %v1559 = vpack.c.bf16 %v1470, %v1466
  %v1560 = vpack.c.bf16 %v1471, %v1467
  %v1561 = vpack.c.bf16 %v1358, %v1472
  %v1562 = vpack.c.bf16 %v1358, %v1473
  %v1563 = vpack.c.bf16 %v1358, %v1474
  %v1564 = vpack.c.bf16 %v1358, %v1475
  %v1565 = vpack.c.bf16 %v1358, %v1358
  %v1566 = vld [vmem:[%s3] sm:$0xff]
  %v1567 = vld [vmem:[%s3 + $0x8] sm:$0xff]
  %v1570 = vunpack.c.l.b16 %v1566
  %v1571 = vunpack.c.h.b16 %v1566
  %v1572 = vunpack.c.l.b16 %v1567
  %v1573 = vunpack.c.h.b16 %v1567
  %v1574 = vpack.c.b16 %v1572, %v1570
  %v1575 = vpack.c.b16 %v1573, %v1571
  %1578 = vmatpush.bf16.msra.mxu0 %v1541
  %1579 = vmatpush.bf16.msra.mxu0 %v1537
  %1580 = vmatpush.bf16.msra.mxu0 %v1533
  %1581 = vmatpush.bf16.msra.mxu0 %v1529
  %1582 = vmatpush.bf16.msra.mxu0 %v1525
  %1583 = vmatpush.bf16.msra.mxu0 %v1521
  %1584 = vmatpush.bf16.msra.mxu0 %v1517
  %1585 = vmatpush.bf16.msra.mxu0 %v1513
  %1586 = vmatmul.bf16.gmra.mxu0 %v1574
  %v1587 = vpop.f32.mrf.mxu0
  %v1588 = vadd.f32 0.0, %v1587
  %v1589 = vpop.f32.mrf.mxu0
  %v1590 = vadd.f32 0.0, %v1589
  %1591 = vdwg.mxu0
  %1592 = vmatpush.bf16.msra.mxu0 %v1565
  %1593 = vmatpush.bf16.msra.mxu0 %v1565
  %1594 = vmatpush.bf16.msra.mxu0 %v1565
  %1595 = vmatpush.bf16.msra.mxu0 %v1561
  %1596 = vmatpush.bf16.msra.mxu0 %v1557
  %1597 = vmatpush.bf16.msra.mxu0 %v1553
  %1598 = vmatpush.bf16.msra.mxu0 %v1549
  %1599 = vmatpush.bf16.msra.mxu0 %v1545
  %1600 = vmatmul.bf16.gmra.mxu0 %v1575
  %v1601 = vpop.f32.mrf.mxu0
  %v1602 = vadd.f32 %v1588, %v1601
  %v1603 = vpop.f32.mrf.mxu0
  %v1604 = vadd.f32 %v1590, %v1603
  %1605 = vdwg.mxu0
  %1606 = vmatpush.bf16.msra.mxu0 %v1542
  %1607 = vmatpush.bf16.msra.mxu0 %v1538
  %1608 = vmatpush.bf16.msra.mxu0 %v1534
  %1609 = vmatpush.bf16.msra.mxu0 %v1530
  %1610 = vmatpush.bf16.msra.mxu0 %v1526
  %1611 = vmatpush.bf16.msra.mxu0 %v1522
  %1612 = vmatpush.bf16.msra.mxu0 %v1518
  %1613 = vmatpush.bf16.msra.mxu0 %v1514
  %1614 = vmatmul.bf16.gmra.mxu0 %v1574
  %v1615 = vpop.f32.mrf.mxu0
  %v1616 = vadd.f32 0.0, %v1615
  %v1617 = vpop.f32.mrf.mxu0
  %v1618 = vadd.f32 0.0, %v1617
  %1619 = vdwg.mxu0
  %1620 = vmatpush.bf16.msra.mxu0 %v1565
  %1621 = vmatpush.bf16.msra.mxu0 %v1565
  %1622 = vmatpush.bf16.msra.mxu0 %v1565
  %1623 = vmatpush.bf16.msra.mxu0 %v1562
  %1624 = vmatpush.bf16.msra.mxu0 %v1558
  %1625 = vmatpush.bf16.msra.mxu0 %v1554
  %1626 = vmatpush.bf16.msra.mxu0 %v1550
  %1627 = vmatpush.bf16.msra.mxu0 %v1546
  %1628 = vmatmul.bf16.gmra.mxu0 %v1575
  %v1629 = vpop.f32.mrf.mxu0
  %v1630 = vadd.f32 %v1616, %v1629
  %v1631 = vpop.f32.mrf.mxu0
  %v1632 = vadd.f32 %v1618, %v1631
  %1633 = vdwg.mxu0
  %1634 = vmatpush.bf16.msra.mxu0 %v1543
  %1635 = vmatpush.bf16.msra.mxu0 %v1539
  %1636 = vmatpush.bf16.msra.mxu0 %v1535
  %1637 = vmatpush.bf16.msra.mxu0 %v1531
  %1638 = vmatpush.bf16.msra.mxu0 %v1527
  %1639 = vmatpush.bf16.msra.mxu0 %v1523
  %1640 = vmatpush.bf16.msra.mxu0 %v1519
  %1641 = vmatpush.bf16.msra.mxu0 %v1515
  %1642 = vmatmul.bf16.gmra.mxu0 %v1574
  %v1643 = vpop.f32.mrf.mxu0
  %v1644 = vadd.f32 0.0, %v1643
  %v1645 = vpop.f32.mrf.mxu0
  %v1646 = vadd.f32 0.0, %v1645
  %1647 = vdwg.mxu0
  %1648 = vmatpush.bf16.msra.mxu0 %v1565
  %1649 = vmatpush.bf16.msra.mxu0 %v1565
  %1650 = vmatpush.bf16.msra.mxu0 %v1565
  %1651 = vmatpush.bf16.msra.mxu0 %v1563
  %1652 = vmatpush.bf16.msra.mxu0 %v1559
  %1653 = vmatpush.bf16.msra.mxu0 %v1555
  %1654 = vmatpush.bf16.msra.mxu0 %v1551
  %1655 = vmatpush.bf16.msra.mxu0 %v1547
  %1656 = vmatmul.bf16.gmra.mxu0 %v1575
  %v1657 = vpop.f32.mrf.mxu0
  %v1658 = vadd.f32 %v1644, %v1657
  %v1659 = vpop.f32.mrf.mxu0
  %v1660 = vadd.f32 %v1646, %v1659
  %1661 = vdwg.mxu0
  %1662 = vmatpush.bf16.msra.mxu0 %v1544
  %1663 = vmatpush.bf16.msra.mxu0 %v1540
  %1664 = vmatpush.bf16.msra.mxu0 %v1536
  %1665 = vmatpush.bf16.msra.mxu0 %v1532
  %1666 = vmatpush.bf16.msra.mxu0 %v1528
  %1667 = vmatpush.bf16.msra.mxu0 %v1524
  %1668 = vmatpush.bf16.msra.mxu0 %v1520
  %1669 = vmatpush.bf16.msra.mxu0 %v1516
  %1670 = vmatmul.bf16.gmra.mxu0 %v1574
  %v1671 = vpop.f32.mrf.mxu0
  %v1672 = vadd.f32 0.0, %v1671
  %v1673 = vpop.f32.mrf.mxu0
  %v1674 = vadd.f32 0.0, %v1673
  %1675 = vdwg.mxu0
  %1676 = vmatpush.bf16.msra.mxu0 %v1565
  %1677 = vmatpush.bf16.msra.mxu0 %v1565
  %1678 = vmatpush.bf16.msra.mxu0 %v1565
  %1679 = vmatpush.bf16.msra.mxu0 %v1564
  %1680 = vmatpush.bf16.msra.mxu0 %v1560
  %1681 = vmatpush.bf16.msra.mxu0 %v1556
  %1682 = vmatpush.bf16.msra.mxu0 %v1552
  %1683 = vmatpush.bf16.msra.mxu0 %v1548
  %1684 = vmatmul.bf16.gmra.mxu0 %v1575
  %v1685 = vpop.f32.mrf.mxu0
  %v1686 = vadd.f32 %v1672, %v1685
  %v1687 = vpop.f32.mrf.mxu0
  %v1688 = vadd.f32 %v1674, %v1687
  %1689 = vdwg.mxu0
  %1698 = vrot.lane.b32.xlu0 %v1602, 127
  %v1699 = vpop.permute.xlu0 %1698
  %1700 = vrot.lane.b32.xlu0 %v1630, 127
  %v1701 = vpop.permute.xlu0 %1700
  %1702 = vrot.lane.b32.xlu0 %v1658, 127
  %v1703 = vpop.permute.xlu0 %1702
  %1704 = vrot.lane.b32.xlu0 %v1686, 127
  %v1705 = vpop.permute.xlu0 %1704
  %1706 = vrot.lane.b32.xlu0 %v1604, 127
  %v1707 = vpop.permute.xlu0 %1706
  %1708 = vrot.lane.b32.xlu0 %v1632, 127
  %v1709 = vpop.permute.xlu0 %1708
  %1710 = vrot.lane.b32.xlu0 %v1660, 127
  %v1711 = vpop.permute.xlu0 %1710
  %1712 = vrot.lane.b32.xlu0 %v1688, 127
  %v1713 = vpop.permute.xlu0 %1712
  %v1714 = vsel %vm1059, %v1699, %v1701
  %v1715 = vsel %vm1059, %v1701, %v1703
  %v1716 = vsel %vm1059, %v1703, %v1705
  %v1717 = vsel %vm1059, %v1705, %v1058
  %v1718 = vsel %vm1059, %v1707, %v1709
  %v1719 = vsel %vm1059, %v1709, %v1711
  %v1720 = vsel %vm1059, %v1711, %v1713
  %v1721 = vsel %vm1059, %v1713, %v1058
  %v1730 = vmax.f32 %v1602, %v1714
  %v1731 = vmax.f32 %v1630, %v1715
  %v1732 = vmax.f32 %v1658, %v1716
  %v1733 = vmax.f32 %v1686, %v1717
  %v1734 = vmax.f32 %v1604, %v1718
  %v1735 = vmax.f32 %v1632, %v1719
  %v1736 = vmax.f32 %v1660, %v1720
  %v1737 = vmax.f32 %v1688, %v1721
  %1738 = vrot.lane.b32.xlu0 %v1602, 114
  %v1739 = vpop.permute.xlu0 %1738
  %1740 = vrot.lane.b32.xlu0 %v1630, 114
  %v1741 = vpop.permute.xlu0 %1740
  %1742 = vrot.lane.b32.xlu0 %v1658, 114
  %v1743 = vpop.permute.xlu0 %1742
  %1744 = vrot.lane.b32.xlu0 %v1686, 114
  %v1745 = vpop.permute.xlu0 %1744
  %1746 = vrot.lane.b32.xlu0 %v1604, 114
  %v1747 = vpop.permute.xlu0 %1746
  %1748 = vrot.lane.b32.xlu0 %v1632, 114
  %v1749 = vpop.permute.xlu0 %1748
  %1750 = vrot.lane.b32.xlu0 %v1660, 114
  %v1751 = vpop.permute.xlu0 %1750
  %1752 = vrot.lane.b32.xlu0 %v1688, 114
  %v1753 = vpop.permute.xlu0 %1752
  %v1754 = vsel %vm1135, %v1739, %v1741
  %v1755 = vsel %vm1135, %v1741, %v1743
  %v1756 = vsel %vm1135, %v1743, %v1745
  %v1757 = vsel %vm1135, %v1745, %v1134
  %v1758 = vsel %vm1135, %v1747, %v1749
  %v1759 = vsel %vm1135, %v1749, %v1751
  %v1760 = vsel %vm1135, %v1751, %v1753
  %v1761 = vsel %vm1135, %v1753, %v1134
  %v1770 = vmax.f32 %v1730, %v1754
  %v1771 = vmax.f32 %v1731, %v1755
  %v1772 = vmax.f32 %v1732, %v1756
  %v1773 = vmax.f32 %v1733, %v1757
  %v1774 = vmax.f32 %v1734, %v1758
  %v1775 = vmax.f32 %v1735, %v1759
  %v1776 = vmax.f32 %v1736, %v1760
  %v1777 = vmax.f32 %v1737, %v1761
  %1778 = vrot.lane.b32.xlu0 %v1602, 113
  %v1779 = vpop.permute.xlu0 %1778
  %1780 = vrot.lane.b32.xlu0 %v1630, 113
  %v1781 = vpop.permute.xlu0 %1780
  %1782 = vrot.lane.b32.xlu0 %v1658, 113
  %v1783 = vpop.permute.xlu0 %1782
  %1784 = vrot.lane.b32.xlu0 %v1686, 113
  %v1785 = vpop.permute.xlu0 %1784
  %1786 = vrot.lane.b32.xlu0 %v1604, 113
  %v1787 = vpop.permute.xlu0 %1786
  %1788 = vrot.lane.b32.xlu0 %v1632, 113
  %v1789 = vpop.permute.xlu0 %1788
  %1790 = vrot.lane.b32.xlu0 %v1660, 113
  %v1791 = vpop.permute.xlu0 %1790
  %1792 = vrot.lane.b32.xlu0 %v1688, 113
  %v1793 = vpop.permute.xlu0 %1792
  %v1794 = vsel %vm1154, %v1779, %v1781
  %v1795 = vsel %vm1154, %v1781, %v1783
  %v1796 = vsel %vm1154, %v1783, %v1785
  %v1797 = vsel %vm1154, %v1785, %v1153
  %v1798 = vsel %vm1154, %v1787, %v1789
  %v1799 = vsel %vm1154, %v1789, %v1791
  %v1800 = vsel %vm1154, %v1791, %v1793
  %v1801 = vsel %vm1154, %v1793, %v1153
  %v1810 = vmax.f32 %v1770, %v1794
  %v1811 = vmax.f32 %v1771, %v1795
  %v1812 = vmax.f32 %v1772, %v1796
  %v1813 = vmax.f32 %v1773, %v1797
  %v1814 = vmax.f32 %v1774, %v1798
  %v1815 = vmax.f32 %v1775, %v1799
  %v1816 = vmax.f32 %v1776, %v1800
  %v1817 = vmax.f32 %v1777, %v1801
  %v1818 = vld [vmem:[%s4] sm:$0xff]
  %v1819 = vld [vmem:[%s4 + $0x8] sm:$0xff]
  %1821 = vset.pattern.permute.xlu0 0
  %1822 = vperm.xlu0 %1821, %v1818
  %v1823 = vpop.permute.xlu0 %1822
  %1826 = vset.pattern.permute.xlu0 0
  %1827 = vperm.xlu0 %1826, %v1819
  %v1828 = vpop.permute.xlu0 %1827
  %v1830 = vadd.f32 %v1810, %v1823
  %v1831 = vadd.f32 %v1811, %v1823
  %v1832 = vadd.f32 %v1812, %v1823
  %v1833 = vadd.f32 %v1813, %v1823
  %v1834 = vadd.f32 %v1814, %v1828
  %v1835 = vadd.f32 %v1815, %v1828
  %v1836 = vadd.f32 %v1816, %v1828
  %v1837 = vadd.f32 %v1817, %v1828
  %v1838 = vmax.f32 %v1830, 0.0
  %v1839 = vmax.f32 %v1831, 0.0
  %v1840 = vmax.f32 %v1832, 0.0
  %v1841 = vmax.f32 %v1833, 0.0
  %v1842 = vmax.f32 %v1834, 0.0
  %v1843 = vmax.f32 %v1835, 0.0
  %v1844 = vmax.f32 %v1836, 0.0
  %v1845 = vmax.f32 %v1837, 0.0
  %v1846 = vpack.c.bf16 %v1842, %v1838
  %v1847 = vpack.c.bf16 %v1843, %v1839
  %v1848 = vpack.c.bf16 %v1844, %v1840
  %v1849 = vpack.c.bf16 %v1845, %v1841
  %v1850 = vld [vmem:[%s5] sm:$0xf]
  %v1851 = vld [vmem:[%s5 + $0x4] sm:$0xf]
  %v1852 = vld [vmem:[%s5 + $0x8] sm:$0xf]
  %v1853 = vld [vmem:[%s5 + $0xc] sm:$0xf]
  %v1854 = vld [vmem:[%s5 + $0x10] sm:$0xf]
  %v1855 = vld [vmem:[%s5 + $0x14] sm:$0xf]
  %v1856 = vld [vmem:[%s5 + $0x18] sm:$0xf]
  %v1857 = vld [vmem:[%s5 + $0x1c] sm:$0xf]
  %v1858 = vld [vmem:[%s5 + $0x20] sm:$0xf]
  %v1859 = vld [vmem:[%s5 + $0x24] sm:$0xf]
  %v1860 = vld [vmem:[%s5 + $0x28] sm:$0xf]
  %v1861 = vld [vmem:[%s5 + $0x2c] sm:$0xf]
  %v1862 = vld [vmem:[%s5 + $0x30] sm:$0xf]
  %v1863 = vld [vmem:[%s5 + $0x34] sm:$0xf]
  %v1864 = vld [vmem:[%s5 + $0x38] sm:$0xf]
  %v1865 = vld [vmem:[%s5 + $0x3c] sm:$0xf]
  %v1866 = vld [vmem:[%s5 + $0x40] sm:$0xf]
  %v1867 = vld [vmem:[%s5 + $0x44] sm:$0xf]
  %v1868 = vld [vmem:[%s5 + $0x48] sm:$0xf]
  %v1869 = vld [vmem:[%s5 + $0x4c] sm:$0xf]
  %v1870 = vld [vmem:[%s5 + $0x50] sm:$0xf]
  %v1871 = vld [vmem:[%s5 + $0x54] sm:$0xf]
  %v1872 = vld [vmem:[%s5 + $0x58] sm:$0xf]
  %v1873 = vld [vmem:[%s5 + $0x5c] sm:$0xf]
  %v1874 = vld [vmem:[%s5 + $0x60] sm:$0xf]
  %v1875 = vld [vmem:[%s5 + $0x64] sm:$0xf]
  %v1876 = vld [vmem:[%s5 + $0x68] sm:$0xf]
  %v1877 = vld [vmem:[%s5 + $0x6c] sm:$0xf]
  %v1878 = vld [vmem:[%s5 + $0x70] sm:$0xf]
  %v1879 = vld [vmem:[%s5 + $0x74] sm:$0xf]
  %v1880 = vld [vmem:[%s5 + $0x78] sm:$0xf]
  %v1881 = vld [vmem:[%s5 + $0x7c] sm:$0xf]
  %v1882 = vld [vmem:[%s5 + $0x80] sm:$0xf]
  %v1883 = vld [vmem:[%s5 + $0x84] sm:$0xf]
  %v1884 = vld [vmem:[%s5 + $0x88] sm:$0xf]
  %v1885 = vld [vmem:[%s5 + $0x8c] sm:$0xf]
  %v1886 = vld [vmem:[%s5 + $0x90] sm:$0xf]
  %v1887 = vld [vmem:[%s5 + $0x94] sm:$0xf]
  %v1888 = vld [vmem:[%s5 + $0x98] sm:$0xf]
  %v1889 = vld [vmem:[%s5 + $0x9c] sm:$0xf]
  %v1890 = vld [vmem:[%s5 + $0xa0] sm:$0xf]
  %v1891 = vld [vmem:[%s5 + $0xa4] sm:$0xf]
  %v1892 = vld [vmem:[%s5 + $0xa8] sm:$0xf]
  %v1893 = vld [vmem:[%s5 + $0xac] sm:$0xf]
  %v1894 = vld [vmem:[%s5 + $0xb0] sm:$0xf]
  %v1895 = vld [vmem:[%s5 + $0xb4] sm:$0xf]
  %v1896 = vld [vmem:[%s5 + $0xb8] sm:$0xf]
  %v1897 = vld [vmem:[%s5 + $0xbc] sm:$0xf]
  %v1898 = vld [vmem:[%s5 + $0xc0] sm:$0xf]
  %v1899 = vld [vmem:[%s5 + $0xc4] sm:$0xf]
  %v1900 = vld [vmem:[%s5 + $0xc8] sm:$0xf]
  %v1901 = vld [vmem:[%s5 + $0xcc] sm:$0xf]
  %v1902 = vld [vmem:[%s5 + $0xd0] sm:$0xf]
  %v1903 = vld [vmem:[%s5 + $0xd4] sm:$0xf]
  %v1904 = vld [vmem:[%s5 + $0xd8] sm:$0xf]
  %v1905 = vld [vmem:[%s5 + $0xdc] sm:$0xf]
  %v1906 = vld [vmem:[%s5 + $0xe0] sm:$0xf]
  %v1907 = vld [vmem:[%s5 + $0xe4] sm:$0xf]
  %v1908 = vld [vmem:[%s5 + $0xe8] sm:$0xf]
  %v1909 = vld [vmem:[%s5 + $0xec] sm:$0xf]
  %v1910 = vld [vmem:[%s5 + $0xf0] sm:$0xf]
  %v1911 = vld [vmem:[%s5 + $0xf4] sm:$0xf]
  %v1912 = vld [vmem:[%s5 + $0xf8] sm:$0xf]
  %v1913 = vld [vmem:[%s5 + $0xfc] sm:$0xf]
  %v1978 = vunpack.c.l.b16 %v1850
  %v1979 = vunpack.c.l.b16 %v1851
  %v1980 = vunpack.c.l.b16 %v1852
  %v1981 = vunpack.c.l.b16 %v1853
  %v1982 = vunpack.c.l.b16 %v1854
  %v1983 = vunpack.c.l.b16 %v1855
  %v1984 = vunpack.c.l.b16 %v1856
  %v1985 = vunpack.c.l.b16 %v1857
  %v1986 = vunpack.c.l.b16 %v1858
  %v1987 = vunpack.c.l.b16 %v1859
  %v1988 = vunpack.c.l.b16 %v1860
  %v1989 = vunpack.c.l.b16 %v1861
  %v1990 = vunpack.c.l.b16 %v1862
  %v1991 = vunpack.c.l.b16 %v1863
  %v1992 = vunpack.c.l.b16 %v1864
  %v1993 = vunpack.c.l.b16 %v1865
  %v1994 = vunpack.c.l.b16 %v1866
  %v1995 = vunpack.c.l.b16 %v1867
  %v1996 = vunpack.c.l.b16 %v1868
  %v1997 = vunpack.c.l.b16 %v1869
  %v1998 = vunpack.c.l.b16 %v1870
  %v1999 = vunpack.c.l.b16 %v1871
  %v2000 = vunpack.c.l.b16 %v1872
  %v2001 = vunpack.c.l.b16 %v1873
  %v2002 = vunpack.c.l.b16 %v1874
  %v2003 = vunpack.c.l.b16 %v1875
  %v2004 = vunpack.c.l.b16 %v1876
  %v2005 = vunpack.c.l.b16 %v1877
  %v2006 = vunpack.c.l.b16 %v1878
  %v2007 = vunpack.c.l.b16 %v1879
  %v2008 = vunpack.c.l.b16 %v1880
  %v2009 = vunpack.c.l.b16 %v1881
  %v2010 = vunpack.c.l.b16 %v1882
  %v2011 = vunpack.c.l.b16 %v1883
  %v2012 = vunpack.c.l.b16 %v1884
  %v2013 = vunpack.c.l.b16 %v1885
  %v2014 = vunpack.c.l.b16 %v1886
  %v2015 = vunpack.c.l.b16 %v1887
  %v2016 = vunpack.c.l.b16 %v1888
  %v2017 = vunpack.c.l.b16 %v1889
  %v2018 = vunpack.c.l.b16 %v1890
  %v2019 = vunpack.c.l.b16 %v1891
  %v2020 = vunpack.c.l.b16 %v1892
  %v2021 = vunpack.c.l.b16 %v1893
  %v2022 = vunpack.c.l.b16 %v1894
  %v2023 = vunpack.c.l.b16 %v1895
  %v2024 = vunpack.c.l.b16 %v1896
  %v2025 = vunpack.c.l.b16 %v1897
  %v2026 = vunpack.c.l.b16 %v1898
  %v2027 = vunpack.c.l.b16 %v1899
  %v2028 = vunpack.c.l.b16 %v1900
  %v2029 = vunpack.c.l.b16 %v1901
  %v2030 = vunpack.c.l.b16 %v1902
  %v2031 = vunpack.c.l.b16 %v1903
  %v2032 = vunpack.c.l.b16 %v1904
  %v2033 = vunpack.c.l.b16 %v1905
  %v2034 = vunpack.c.l.b16 %v1906
  %v2035 = vunpack.c.l.b16 %v1907
  %v2036 = vunpack.c.l.b16 %v1908
  %v2037 = vunpack.c.l.b16 %v1909
  %v2038 = vunpack.c.l.b16 %v1910
  %v2039 = vunpack.c.l.b16 %v1911
  %v2040 = vunpack.c.l.b16 %v1912
  %v2041 = vunpack.c.l.b16 %v1913
  %v2042 = vpack.c.b16 %v1979, %v1978
  %v2043 = vpack.c.b16 %v1981, %v1980
  %v2044 = vpack.c.b16 %v1983, %v1982
  %v2045 = vpack.c.b16 %v1985, %v1984
  %v2046 = vpack.c.b16 %v1987, %v1986
  %v2047 = vpack.c.b16 %v1989, %v1988
  %v2048 = vpack.c.b16 %v1991, %v1990
  %v2049 = vpack.c.b16 %v1993, %v1992
  %v2050 = vpack.c.b16 %v1995, %v1994
  %v2051 = vpack.c.b16 %v1997, %v1996
  %v2052 = vpack.c.b16 %v1999, %v1998
  %v2053 = vpack.c.b16 %v2001, %v2000
  %v2054 = vpack.c.b16 %v2003, %v2002
  %v2055 = vpack.c.b16 %v2005, %v2004
  %v2056 = vpack.c.b16 %v2007, %v2006
  %v2057 = vpack.c.b16 %v2009, %v2008
  %v2058 = vpack.c.b16 %v2011, %v2010
  %v2059 = vpack.c.b16 %v2013, %v2012
  %v2060 = vpack.c.b16 %v2015, %v2014
  %v2061 = vpack.c.b16 %v2017, %v2016
  %v2062 = vpack.c.b16 %v2019, %v2018
  %v2063 = vpack.c.b16 %v2021, %v2020
  %v2064 = vpack.c.b16 %v2023, %v2022
  %v2065 = vpack.c.b16 %v2025, %v2024
  %v2066 = vpack.c.b16 %v2027, %v2026
  %v2067 = vpack.c.b16 %v2029, %v2028
  %v2068 = vpack.c.b16 %v2031, %v2030
  %v2069 = vpack.c.b16 %v2033, %v2032
  %v2070 = vpack.c.b16 %v2035, %v2034
  %v2071 = vpack.c.b16 %v2037, %v2036
  %v2072 = vpack.c.b16 %v2039, %v2038
  %v2073 = vpack.c.b16 %v2041, %v2040
  %2106 = vmatpush.bf16.msra.mxu0 %v2049
  %2107 = vmatpush.bf16.msra.mxu0 %v2048
  %2108 = vmatpush.bf16.msra.mxu0 %v2047
  %2109 = vmatpush.bf16.msra.mxu0 %v2046
  %2110 = vmatpush.bf16.msra.mxu0 %v2045
  %2111 = vmatpush.bf16.msra.mxu0 %v2044
  %2112 = vmatpush.bf16.msra.mxu0 %v2043
  %2113 = vmatpush.bf16.msra.mxu0 %v2042
  %2114 = vmatmul.bf16.gmra.mxu0 %v1846
  %v2115 = vpop.f32.mrf.mxu0
  %v2116 = vadd.f32 0.0, %v2115
  %v2117 = vpop.f32.mrf.mxu0
  %v2118 = vadd.f32 0.0, %v2117
  %2119 = vdwg.mxu0
  %2120 = vmatpush.bf16.msra.mxu0 %v2057
  %2121 = vmatpush.bf16.msra.mxu0 %v2056
  %2122 = vmatpush.bf16.msra.mxu0 %v2055
  %2123 = vmatpush.bf16.msra.mxu0 %v2054
  %2124 = vmatpush.bf16.msra.mxu0 %v2053
  %2125 = vmatpush.bf16.msra.mxu0 %v2052
  %2126 = vmatpush.bf16.msra.mxu0 %v2051
  %2127 = vmatpush.bf16.msra.mxu0 %v2050
  %2128 = vmatmul.bf16.gmra.mxu0 %v1847
  %v2129 = vpop.f32.mrf.mxu0
  %v2130 = vadd.f32 %v2116, %v2129
  %v2131 = vpop.f32.mrf.mxu0
  %v2132 = vadd.f32 %v2118, %v2131
  %2133 = vdwg.mxu0
  %2134 = vmatpush.bf16.msra.mxu0 %v2065
  %2135 = vmatpush.bf16.msra.mxu0 %v2064
  %2136 = vmatpush.bf16.msra.mxu0 %v2063
  %2137 = vmatpush.bf16.msra.mxu0 %v2062
  %2138 = vmatpush.bf16.msra.mxu0 %v2061
  %2139 = vmatpush.bf16.msra.mxu0 %v2060
  %2140 = vmatpush.bf16.msra.mxu0 %v2059
  %2141 = vmatpush.bf16.msra.mxu0 %v2058
  %2142 = vmatmul.bf16.gmra.mxu0 %v1848
  %v2143 = vpop.f32.mrf.mxu0
  %v2144 = vadd.f32 %v2130, %v2143
  %v2145 = vpop.f32.mrf.mxu0
  %v2146 = vadd.f32 %v2132, %v2145
  %2147 = vdwg.mxu0
  %2148 = vmatpush.bf16.msra.mxu0 %v2073
  %2149 = vmatpush.bf16.msra.mxu0 %v2072
  %2150 = vmatpush.bf16.msra.mxu0 %v2071
  %2151 = vmatpush.bf16.msra.mxu0 %v2070
  %2152 = vmatpush.bf16.msra.mxu0 %v2069
  %2153 = vmatpush.bf16.msra.mxu0 %v2068
  %2154 = vmatpush.bf16.msra.mxu0 %v2067
  %2155 = vmatpush.bf16.msra.mxu0 %v2066
  %2156 = vmatmul.bf16.gmra.mxu0 %v1849
  %v2157 = vpop.f32.mrf.mxu0
  %v2158 = vadd.f32 %v2144, %v2157
  %v2159 = vpop.f32.mrf.mxu0
  %v2160 = vadd.f32 %v2146, %v2159
  %2161 = vdwg.mxu0
  %2164 = vrot.lane.b32.xlu0 %v2158, 126
  %v2165 = vpop.permute.xlu0 %2164
  %2166 = vrot.lane.b32.xlu0 %v2160, 126
  %v2167 = vpop.permute.xlu0 %2166
  %2170 = vrot.lane.b32.xlu0 %v2158, 124
  %v2171 = vpop.permute.xlu0 %2170
  %2172 = vrot.lane.b32.xlu0 %v2160, 124
  %v2173 = vpop.permute.xlu0 %2172
  %2176 = vrot.lane.b32.xlu0 %v2158, 122
  %v2177 = vpop.permute.xlu0 %2176
  %2178 = vrot.lane.b32.xlu0 %v2160, 122
  %v2179 = vpop.permute.xlu0 %2178
  %2182 = vrot.lane.b32.xlu0 %v2158, 120
  %v2183 = vpop.permute.xlu0 %2182
  %2184 = vrot.lane.b32.xlu0 %v2160, 120
  %v2185 = vpop.permute.xlu0 %2184
  %2188 = vrot.lane.b32.xlu0 %v2158, 118
  %v2189 = vpop.permute.xlu0 %2188
  %2190 = vrot.lane.b32.xlu0 %v2160, 118
  %v2191 = vpop.permute.xlu0 %2190
  %2194 = vrot.lane.b32.xlu0 %v2158, 116
  %v2195 = vpop.permute.xlu0 %2194
  %2196 = vrot.lane.b32.xlu0 %v2160, 116
  %v2197 = vpop.permute.xlu0 %2196
  %2200 = vrot.lane.b32.xlu0 %v2158, 114
  %v2201 = vpop.permute.xlu0 %2200
  %2202 = vrot.lane.b32.xlu0 %v2160, 114
  %v2203 = vpop.permute.xlu0 %2202
  %2206 = vrot.lane.b32.xlu0 %v2158, 112
  %v2207 = vpop.permute.xlu0 %2206
  %2208 = vrot.lane.b32.xlu0 %v2160, 112
  %v2209 = vpop.permute.xlu0 %2208
  %2212 = vrot.lane.b32.xlu0 %v2158, 110
  %v2213 = vpop.permute.xlu0 %2212
  %2214 = vrot.lane.b32.xlu0 %v2160, 110
  %v2215 = vpop.permute.xlu0 %2214
  %2218 = vrot.lane.b32.xlu0 %v2158, 108
  %v2219 = vpop.permute.xlu0 %2218
  %2220 = vrot.lane.b32.xlu0 %v2160, 108
  %v2221 = vpop.permute.xlu0 %2220
  %2224 = vrot.lane.b32.xlu0 %v2158, 106
  %v2225 = vpop.permute.xlu0 %2224
  %2226 = vrot.lane.b32.xlu0 %v2160, 106
  %v2227 = vpop.permute.xlu0 %2226
  %2230 = vrot.lane.b32.xlu0 %v2158, 104
  %v2231 = vpop.permute.xlu0 %2230
  %2232 = vrot.lane.b32.xlu0 %v2160, 104
  %v2233 = vpop.permute.xlu0 %2232
  %2236 = vrot.lane.b32.xlu0 %v2158, 102
  %v2237 = vpop.permute.xlu0 %2236
  %2238 = vrot.lane.b32.xlu0 %v2160, 102
  %v2239 = vpop.permute.xlu0 %2238
  %2242 = vrot.lane.b32.xlu0 %v2158, 100
  %v2243 = vpop.permute.xlu0 %2242
  %2244 = vrot.lane.b32.xlu0 %v2160, 100
  %v2245 = vpop.permute.xlu0 %2244
  %2248 = vrot.lane.b32.xlu0 %v2158, 98
  %v2249 = vpop.permute.xlu0 %2248
  %2250 = vrot.lane.b32.xlu0 %v2160, 98
  %v2251 = vpop.permute.xlu0 %2250
  %2254 = vrot.lane.b32.xlu0 %v2158, 96
  %v2255 = vpop.permute.xlu0 %2254
  %2256 = vrot.lane.b32.xlu0 %v2160, 96
  %v2257 = vpop.permute.xlu0 %2256
  %2258 = vrot.lane.b32.xlu0 %v2165, 96
  %v2259 = vpop.permute.xlu0 %2258
  %2260 = vrot.lane.b32.xlu0 %v2167, 96
  %v2261 = vpop.permute.xlu0 %2260
  %2262 = vrot.lane.b32.xlu0 %v2171, 96
  %v2263 = vpop.permute.xlu0 %2262
  %2264 = vrot.lane.b32.xlu0 %v2173, 96
  %v2265 = vpop.permute.xlu0 %2264
  %2266 = vrot.lane.b32.xlu0 %v2177, 96
  %v2267 = vpop.permute.xlu0 %2266
  %2268 = vrot.lane.b32.xlu0 %v2179, 96
  %v2269 = vpop.permute.xlu0 %2268
  %2270 = vrot.lane.b32.xlu0 %v2183, 96
  %v2271 = vpop.permute.xlu0 %2270
  %2272 = vrot.lane.b32.xlu0 %v2185, 96
  %v2273 = vpop.permute.xlu0 %2272
  %2274 = vrot.lane.b32.xlu0 %v2189, 96
  %v2275 = vpop.permute.xlu0 %2274
  %2276 = vrot.lane.b32.xlu0 %v2191, 96
  %v2277 = vpop.permute.xlu0 %2276
  %2278 = vrot.lane.b32.xlu0 %v2195, 96
  %v2279 = vpop.permute.xlu0 %2278
  %2280 = vrot.lane.b32.xlu0 %v2197, 96
  %v2281 = vpop.permute.xlu0 %2280
  %2282 = vrot.lane.b32.xlu0 %v2201, 96
  %v2283 = vpop.permute.xlu0 %2282
  %2284 = vrot.lane.b32.xlu0 %v2203, 96
  %v2285 = vpop.permute.xlu0 %2284
  %2286 = vrot.lane.b32.xlu0 %v2207, 96
  %v2287 = vpop.permute.xlu0 %2286
  %2288 = vrot.lane.b32.xlu0 %v2209, 96
  %v2289 = vpop.permute.xlu0 %2288
  %v2309 = vpack.c.bf16 %v2160, %v2158
  %v2310 = vpack.c.bf16 %v2167, %v2165
  %v2311 = vpack.c.bf16 %v2173, %v2171
  %v2312 = vpack.c.bf16 %v2179, %v2177
  %v2313 = vpack.c.bf16 %v2185, %v2183
  %v2314 = vpack.c.bf16 %v2191, %v2189
  %v2315 = vpack.c.bf16 %v2197, %v2195
  %v2316 = vpack.c.bf16 %v2203, %v2201
  %v2317 = vpack.c.bf16 %v2209, %v2207
  %v2318 = vpack.c.bf16 %v2215, %v2213
  %v2319 = vpack.c.bf16 %v2221, %v2219
  %v2320 = vpack.c.bf16 %v2227, %v2225
  %v2321 = vpack.c.bf16 %v2233, %v2231
  %v2322 = vpack.c.bf16 %v2239, %v2237
  %v2323 = vpack.c.bf16 %v2245, %v2243
  %v2324 = vpack.c.bf16 %v2251, %v2249
  %v2325 = vpack.c.bf16 %v2257, %v2255
  %v2326 = vpack.c.bf16 %v2261, %v2259
  %v2327 = vpack.c.bf16 %v2265, %v2263
  %v2328 = vpack.c.bf16 %v2269, %v2267
  %v2329 = vpack.c.bf16 %v2273, %v2271
  %v2330 = vpack.c.bf16 %v2277, %v2275
  %v2331 = vpack.c.bf16 %v2281, %v2279
  %v2332 = vpack.c.bf16 %v2285, %v2283
  %v2333 = vpack.c.bf16 %v2289, %v2287
  %v2334 = vpack.c.bf16 %v1305, %v1305
  %v2335 = vld [vmem:[%s6] sm:$0xff]
  %v2336 = vld [vmem:[%s6 + $0x8] sm:$0xff]
  %v2337 = vld [vmem:[%s6 + $0x10] sm:$0xff]
  %v2338 = vld [vmem:[%s6 + $0x18] sm:$0xff]
  %v2339 = vld [vmem:[%s6 + $0x20] sm:$0xff]
  %v2340 = vld [vmem:[%s6 + $0x28] sm:$0xff]
  %v2341 = vld [vmem:[%s6 + $0x30] sm:$0xff]
  %v2342 = vld [vmem:[%s6 + $0x38] sm:$0xff]
  %v2343 = vld [vmem:[%s6 + $0x40] sm:$0xff]
  %v2344 = vld [vmem:[%s6 + $0x48] sm:$0xff]
  %v2345 = vld [vmem:[%s6 + $0x50] sm:$0xff]
  %v2346 = vld [vmem:[%s6 + $0x58] sm:$0xff]
  %v2347 = vld [vmem:[%s6 + $0x60] sm:$0xff]
  %v2348 = vld [vmem:[%s6 + $0x68] sm:$0xff]
  %v2349 = vld [vmem:[%s6 + $0x70] sm:$0xff]
  %v2350 = vld [vmem:[%s6 + $0x78] sm:$0xff]
  %v2351 = vld [vmem:[%s6 + $0x80] sm:$0xff]
  %v2352 = vld [vmem:[%s6 + $0x88] sm:$0xff]
  %v2353 = vld [vmem:[%s6 + $0x90] sm:$0xff]
  %v2354 = vld [vmem:[%s6 + $0x98] sm:$0xff]
  %v2355 = vld [vmem:[%s6 + $0xa0] sm:$0xff]
  %v2356 = vld [vmem:[%s6 + $0xa8] sm:$0xff]
  %v2357 = vld [vmem:[%s6 + $0xb0] sm:$0xff]
  %v2358 = vld [vmem:[%s6 + $0xb8] sm:$0xff]
  %v2359 = vld [vmem:[%s6 + $0xc0] sm:$0xff]
  %v2360 = vld [vmem:[%s6 + $0xc8] sm:$0xff]
  %v2361 = vld [vmem:[%s6 + $0xd0] sm:$0xff]
  %v2362 = vld [vmem:[%s6 + $0xd8] sm:$0xff]
  %v2363 = vld [vmem:[%s6 + $0xe0] sm:$0xff]
  %v2364 = vld [vmem:[%s6 + $0xe8] sm:$0xff]
  %v2365 = vld [vmem:[%s6 + $0xf0] sm:$0xff]
  %v2366 = vld [vmem:[%s6 + $0xf8] sm:$0xff]
  %v2367 = vld [vmem:[%s7] sm:$0xff]
  %v2368 = vld [vmem:[%s7 + $0x8] sm:$0xff]
  %v2369 = vld [vmem:[%s7 + $0x10] sm:$0xff]
  %v2370 = vld [vmem:[%s7 + $0x18] sm:$0xff]
  %v2371 = vld [vmem:[%s7 + $0x20] sm:$0xff]
  %v2372 = vld [vmem:[%s7 + $0x28] sm:$0xff]
  %v2373 = vld [vmem:[%s7 + $0x30] sm:$0xff]
  %v2374 = vld [vmem:[%s7 + $0x38] sm:$0xff]
  %v2375 = vld [vmem:[%s7 + $0x40] sm:$0xff]
  %v2376 = vld [vmem:[%s7 + $0x48] sm:$0xff]
  %v2377 = vld [vmem:[%s7 + $0x50] sm:$0xff]
  %v2378 = vld [vmem:[%s7 + $0x58] sm:$0xff]
  %v2379 = vld [vmem:[%s7 + $0x60] sm:$0xff]
  %v2380 = vld [vmem:[%s7 + $0x68] sm:$0xff]
  %v2381 = vld [vmem:[%s7 + $0x70] sm:$0xff]
  %v2382 = vld [vmem:[%s7 + $0x78] sm:$0xff]
  %2384 = vset.pattern.permute.xlu0 0
  %2385 = vperm.xlu0 %2384, %v2367
  %v2386 = vpop.permute.xlu0 %2385
  %2389 = vset.pattern.permute.xlu0 0
  %2390 = vperm.xlu0 %2389, %v2368
  %v2391 = vpop.permute.xlu0 %2390
  %2394 = vset.pattern.permute.xlu0 0
  %2395 = vperm.xlu0 %2394, %v2369
  %v2396 = vpop.permute.xlu0 %2395
  %2399 = vset.pattern.permute.xlu0 0
  %2400 = vperm.xlu0 %2399, %v2370
  %v2401 = vpop.permute.xlu0 %2400
  %2404 = vset.pattern.permute.xlu0 0
  %2405 = vperm.xlu0 %2404, %v2371
  %v2406 = vpop.permute.xlu0 %2405
  %2409 = vset.pattern.permute.xlu0 0
  %2410 = vperm.xlu0 %2409, %v2372
  %v2411 = vpop.permute.xlu0 %2410
  %2414 = vset.pattern.permute.xlu0 0
  %2415 = vperm.xlu0 %2414, %v2373
  %v2416 = vpop.permute.xlu0 %2415
  %2419 = vset.pattern.permute.xlu0 0
  %2420 = vperm.xlu0 %2419, %v2374
  %v2421 = vpop.permute.xlu0 %2420
  %2424 = vset.pattern.permute.xlu0 0
  %2425 = vperm.xlu0 %2424, %v2375
  %v2426 = vpop.permute.xlu0 %2425
  %2429 = vset.pattern.permute.xlu0 0
  %2430 = vperm.xlu0 %2429, %v2376
  %v2431 = vpop.permute.xlu0 %2430
  %2434 = vset.pattern.permute.xlu0 0
  %2435 = vperm.xlu0 %2434, %v2377
  %v2436 = vpop.permute.xlu0 %2435
  %2439 = vset.pattern.permute.xlu0 0
  %2440 = vperm.xlu0 %2439, %v2378
  %v2441 = vpop.permute.xlu0 %2440
  %2444 = vset.pattern.permute.xlu0 0
  %2445 = vperm.xlu0 %2444, %v2379
  %v2446 = vpop.permute.xlu0 %2445
  %2449 = vset.pattern.permute.xlu0 0
  %2450 = vperm.xlu0 %2449, %v2380
  %v2451 = vpop.permute.xlu0 %2450
  %2454 = vset.pattern.permute.xlu0 0
  %2455 = vperm.xlu0 %2454, %v2381
  %v2456 = vpop.permute.xlu0 %2455
  %2459 = vset.pattern.permute.xlu0 0
  %2460 = vperm.xlu0 %2459, %v2382
  %v2461 = vpop.permute.xlu0 %2460
  %v2495 = vunpack.c.l.b16 %v2335
  %v2496 = vunpack.c.h.b16 %v2335
  %v2497 = vunpack.c.l.b16 %v2336
  %v2498 = vunpack.c.h.b16 %v2336
  %v2499 = vunpack.c.l.b16 %v2337
  %v2500 = vunpack.c.h.b16 %v2337
  %v2501 = vunpack.c.l.b16 %v2338
  %v2502 = vunpack.c.h.b16 %v2338
  %v2503 = vunpack.c.l.b16 %v2339
  %v2504 = vunpack.c.h.b16 %v2339
  %v2505 = vunpack.c.l.b16 %v2340
  %v2506 = vunpack.c.h.b16 %v2340
  %v2507 = vunpack.c.l.b16 %v2341
  %v2508 = vunpack.c.h.b16 %v2341
  %v2509 = vunpack.c.l.b16 %v2342
  %v2510 = vunpack.c.h.b16 %v2342
  %v2511 = vunpack.c.l.b16 %v2343
  %v2512 = vunpack.c.h.b16 %v2343
  %v2513 = vunpack.c.l.b16 %v2344
  %v2514 = vunpack.c.h.b16 %v2344
  %v2515 = vunpack.c.l.b16 %v2345
  %v2516 = vunpack.c.h.b16 %v2345
  %v2517 = vunpack.c.l.b16 %v2346
  %v2518 = vunpack.c.h.b16 %v2346
  %v2519 = vunpack.c.l.b16 %v2347
  %v2520 = vunpack.c.h.b16 %v2347
  %v2521 = vunpack.c.l.b16 %v2348
  %v2522 = vunpack.c.h.b16 %v2348
  %v2523 = vunpack.c.l.b16 %v2349
  %v2524 = vunpack.c.h.b16 %v2349
  %v2525 = vunpack.c.l.b16 %v2350
  %v2526 = vunpack.c.h.b16 %v2350
  %v2527 = vunpack.c.l.b16 %v2351
  %v2528 = vunpack.c.h.b16 %v2351
  %v2529 = vunpack.c.l.b16 %v2352
  %v2530 = vunpack.c.h.b16 %v2352
  %v2531 = vunpack.c.l.b16 %v2353
  %v2532 = vunpack.c.h.b16 %v2353
  %v2533 = vunpack.c.l.b16 %v2354
  %v2534 = vunpack.c.h.b16 %v2354
  %v2535 = vunpack.c.l.b16 %v2355
  %v2536 = vunpack.c.h.b16 %v2355
  %v2537 = vunpack.c.l.b16 %v2356
  %v2538 = vunpack.c.h.b16 %v2356
  %v2539 = vunpack.c.l.b16 %v2357
  %v2540 = vunpack.c.h.b16 %v2357
  %v2541 = vunpack.c.l.b16 %v2358
  %v2542 = vunpack.c.h.b16 %v2358
  %v2543 = vunpack.c.l.b16 %v2359
  %v2544 = vunpack.c.h.b16 %v2359
  %v2545 = vunpack.c.l.b16 %v2360
  %v2546 = vunpack.c.h.b16 %v2360
  %v2547 = vunpack.c.l.b16 %v2361
  %v2548 = vunpack.c.h.b16 %v2361
  %v2549 = vunpack.c.l.b16 %v2362
  %v2550 = vunpack.c.h.b16 %v2362
  %v2551 = vunpack.c.l.b16 %v2363
  %v2552 = vunpack.c.h.b16 %v2363
  %v2553 = vunpack.c.l.b16 %v2364
  %v2554 = vunpack.c.h.b16 %v2364
  %v2555 = vunpack.c.l.b16 %v2365
  %v2556 = vunpack.c.h.b16 %v2365
  %v2557 = vunpack.c.l.b16 %v2366
  %v2558 = vunpack.c.h.b16 %v2366
  %v2559 = vpack.c.b16 %v2499, %v2495
  %v2560 = vpack.c.b16 %v2500, %v2496
  %v2561 = vpack.c.b16 %v2501, %v2497
  %v2562 = vpack.c.b16 %v2502, %v2498
  %v2563 = vpack.c.b16 %v2507, %v2503
  %v2564 = vpack.c.b16 %v2508, %v2504
  %v2565 = vpack.c.b16 %v2509, %v2505
  %v2566 = vpack.c.b16 %v2510, %v2506
  %v2567 = vpack.c.b16 %v2515, %v2511
  %v2568 = vpack.c.b16 %v2516, %v2512
  %v2569 = vpack.c.b16 %v2517, %v2513
  %v2570 = vpack.c.b16 %v2518, %v2514
  %v2571 = vpack.c.b16 %v2523, %v2519
  %v2572 = vpack.c.b16 %v2524, %v2520
  %v2573 = vpack.c.b16 %v2525, %v2521
  %v2574 = vpack.c.b16 %v2526, %v2522
  %v2575 = vpack.c.b16 %v2531, %v2527
  %v2576 = vpack.c.b16 %v2532, %v2528
  %v2577 = vpack.c.b16 %v2533, %v2529
  %v2578 = vpack.c.b16 %v2534, %v2530
  %v2579 = vpack.c.b16 %v2539, %v2535
  %v2580 = vpack.c.b16 %v2540, %v2536
  %v2581 = vpack.c.b16 %v2541, %v2537
  %v2582 = vpack.c.b16 %v2542, %v2538
  %v2583 = vpack.c.b16 %v2547, %v2543
  %v2584 = vpack.c.b16 %v2548, %v2544
  %v2585 = vpack.c.b16 %v2549, %v2545
  %v2586 = vpack.c.b16 %v2550, %v2546
  %v2587 = vpack.c.b16 %v2555, %v2551
  %v2588 = vpack.c.b16 %v2556, %v2552
  %v2589 = vpack.c.b16 %v2557, %v2553
  %v2590 = vpack.c.b16 %v2558, %v2554
  %2623 = vmatpush.bf16.msra.mxu0 %v2316
  %2624 = vmatpush.bf16.msra.mxu0 %v2315
  %2625 = vmatpush.bf16.msra.mxu0 %v2314
  %2626 = vmatpush.bf16.msra.mxu0 %v2313
  %2627 = vmatpush.bf16.msra.mxu0 %v2312
  %2628 = vmatpush.bf16.msra.mxu0 %v2311
  %2629 = vmatpush.bf16.msra.mxu0 %v2310
  %2630 = vmatpush.bf16.msra.mxu0 %v2309
  %2631 = vmatmul.bf16.gmra.mxu0 %v2559
  %v2632 = vpop.f32.mrf.mxu0
  %v2633 = vadd.f32 %v2386, %v2632
  %v2634 = vpop.f32.mrf.mxu0
  %v2635 = vadd.f32 %v2391, %v2634
  %2636 = vmatmul.bf16.gmra.mxu0 %v2563
  %v2637 = vpop.f32.mrf.mxu0
  %v2638 = vadd.f32 %v2396, %v2637
  %v2639 = vpop.f32.mrf.mxu0
  %v2640 = vadd.f32 %v2401, %v2639
  %2641 = vmatmul.bf16.gmra.mxu0 %v2567
  %v2642 = vpop.f32.mrf.mxu0
  %v2643 = vadd.f32 %v2406, %v2642
  %v2644 = vpop.f32.mrf.mxu0
  %v2645 = vadd.f32 %v2411, %v2644
  %2646 = vmatmul.bf16.gmra.mxu0 %v2571
  %v2647 = vpop.f32.mrf.mxu0
  %v2648 = vadd.f32 %v2416, %v2647
  %v2649 = vpop.f32.mrf.mxu0
  %v2650 = vadd.f32 %v2421, %v2649
  %2651 = vmatmul.bf16.gmra.mxu0 %v2575
  %v2652 = vpop.f32.mrf.mxu0
  %v2653 = vadd.f32 %v2426, %v2652
  %v2654 = vpop.f32.mrf.mxu0
  %v2655 = vadd.f32 %v2431, %v2654
  %2656 = vmatmul.bf16.gmra.mxu0 %v2579
  %v2657 = vpop.f32.mrf.mxu0
  %v2658 = vadd.f32 %v2436, %v2657
  %v2659 = vpop.f32.mrf.mxu0
  %v2660 = vadd.f32 %v2441, %v2659
  %2661 = vmatmul.bf16.gmra.mxu0 %v2583
  %v2662 = vpop.f32.mrf.mxu0
  %v2663 = vadd.f32 %v2446, %v2662
  %v2664 = vpop.f32.mrf.mxu0
  %v2665 = vadd.f32 %v2451, %v2664
  %2666 = vmatmul.bf16.gmra.mxu0 %v2587
  %v2667 = vpop.f32.mrf.mxu0
  %v2668 = vadd.f32 %v2456, %v2667
  %v2669 = vpop.f32.mrf.mxu0
  %v2670 = vadd.f32 %v2461, %v2669
  %2671 = vdwg.mxu0
  %2672 = vmatpush.bf16.msra.mxu0 %v2324
  %2673 = vmatpush.bf16.msra.mxu0 %v2323
  %2674 = vmatpush.bf16.msra.mxu0 %v2322
  %2675 = vmatpush.bf16.msra.mxu0 %v2321
  %2676 = vmatpush.bf16.msra.mxu0 %v2320
  %2677 = vmatpush.bf16.msra.mxu0 %v2319
  %2678 = vmatpush.bf16.msra.mxu0 %v2318
  %2679 = vmatpush.bf16.msra.mxu0 %v2317
  %2680 = vmatmul.bf16.gmra.mxu0 %v2560
  %v2681 = vpop.f32.mrf.mxu0
  %v2682 = vadd.f32 %v2633, %v2681
  %v2683 = vpop.f32.mrf.mxu0
  %v2684 = vadd.f32 %v2635, %v2683
  %2685 = vmatmul.bf16.gmra.mxu0 %v2564
  %v2686 = vpop.f32.mrf.mxu0
  %v2687 = vadd.f32 %v2638, %v2686
  %v2688 = vpop.f32.mrf.mxu0
  %v2689 = vadd.f32 %v2640, %v2688
  %2690 = vmatmul.bf16.gmra.mxu0 %v2568
  %v2691 = vpop.f32.mrf.mxu0
  %v2692 = vadd.f32 %v2643, %v2691
  %v2693 = vpop.f32.mrf.mxu0
  %v2694 = vadd.f32 %v2645, %v2693
  %2695 = vmatmul.bf16.gmra.mxu0 %v2572
  %v2696 = vpop.f32.mrf.mxu0
  %v2697 = vadd.f32 %v2648, %v2696
  %v2698 = vpop.f32.mrf.mxu0
  %v2699 = vadd.f32 %v2650, %v2698
  %2700 = vmatmul.bf16.gmra.mxu0 %v2576
  %v2701 = vpop.f32.mrf.mxu0
  %v2702 = vadd.f32 %v2653, %v2701
  %v2703 = vpop.f32.mrf.mxu0
  %v2704 = vadd.f32 %v2655, %v2703
  %2705 = vmatmul.bf16.gmra.mxu0 %v2580
  %v2706 = vpop.f32.mrf.mxu0
  %v2707 = vadd.f32 %v2658, %v2706
  %v2708 = vpop.f32.mrf.mxu0
  %v2709 = vadd.f32 %v2660, %v2708
  %2710 = vmatmul.bf16.gmra.mxu0 %v2584
  %v2711 = vpop.f32.mrf.mxu0
  %v2712 = vadd.f32 %v2663, %v2711
  %v2713 = vpop.f32.mrf.mxu0
  %v2714 = vadd.f32 %v2665, %v2713
  %2715 = vmatmul.bf16.gmra.mxu0 %v2588
  %v2716 = vpop.f32.mrf.mxu0
  %v2717 = vadd.f32 %v2668, %v2716
  %v2718 = vpop.f32.mrf.mxu0
  %v2719 = vadd.f32 %v2670, %v2718
  %2720 = vdwg.mxu0
  %2721 = vmatpush.bf16.msra.mxu0 %v2332
  %2722 = vmatpush.bf16.msra.mxu0 %v2331
  %2723 = vmatpush.bf16.msra.mxu0 %v2330
  %2724 = vmatpush.bf16.msra.mxu0 %v2329
  %2725 = vmatpush.bf16.msra.mxu0 %v2328
  %2726 = vmatpush.bf16.msra.mxu0 %v2327
  %2727 = vmatpush.bf16.msra.mxu0 %v2326
  %2728 = vmatpush.bf16.msra.mxu0 %v2325
  %2729 = vmatmul.bf16.gmra.mxu0 %v2561
  %v2730 = vpop.f32.mrf.mxu0
  %v2731 = vadd.f32 %v2682, %v2730
  %v2732 = vpop.f32.mrf.mxu0
  %v2733 = vadd.f32 %v2684, %v2732
  %2734 = vmatmul.bf16.gmra.mxu0 %v2565
  %v2735 = vpop.f32.mrf.mxu0
  %v2736 = vadd.f32 %v2687, %v2735
  %v2737 = vpop.f32.mrf.mxu0
  %v2738 = vadd.f32 %v2689, %v2737
  %2739 = vmatmul.bf16.gmra.mxu0 %v2569
  %v2740 = vpop.f32.mrf.mxu0
  %v2741 = vadd.f32 %v2692, %v2740
  %v2742 = vpop.f32.mrf.mxu0
  %v2743 = vadd.f32 %v2694, %v2742
  %2744 = vmatmul.bf16.gmra.mxu0 %v2573
  %v2745 = vpop.f32.mrf.mxu0
  %v2746 = vadd.f32 %v2697, %v2745
  %v2747 = vpop.f32.mrf.mxu0
  %v2748 = vadd.f32 %v2699, %v2747
  %2749 = vmatmul.bf16.gmra.mxu0 %v2577
  %v2750 = vpop.f32.mrf.mxu0
  %v2751 = vadd.f32 %v2702, %v2750
  %v2752 = vpop.f32.mrf.mxu0
  %v2753 = vadd.f32 %v2704, %v2752
  %2754 = vmatmul.bf16.gmra.mxu0 %v2581
  %v2755 = vpop.f32.mrf.mxu0
  %v2756 = vadd.f32 %v2707, %v2755
  %v2757 = vpop.f32.mrf.mxu0
  %v2758 = vadd.f32 %v2709, %v2757
  %2759 = vmatmul.bf16.gmra.mxu0 %v2585
  %v2760 = vpop.f32.mrf.mxu0
  %v2761 = vadd.f32 %v2712, %v2760
  %v2762 = vpop.f32.mrf.mxu0
  %v2763 = vadd.f32 %v2714, %v2762
  %2764 = vmatmul.bf16.gmra.mxu0 %v2589
  %v2765 = vpop.f32.mrf.mxu0
  %v2766 = vadd.f32 %v2717, %v2765
  %v2767 = vpop.f32.mrf.mxu0
  %v2768 = vadd.f32 %v2719, %v2767
  %2769 = vdwg.mxu0
  %2770 = vmatpush.bf16.msra.mxu0 %v2334
  %2771 = vmatpush.bf16.msra.mxu0 %v2334
  %2772 = vmatpush.bf16.msra.mxu0 %v2334
  %2773 = vmatpush.bf16.msra.mxu0 %v2334
  %2774 = vmatpush.bf16.msra.mxu0 %v2334
  %2775 = vmatpush.bf16.msra.mxu0 %v2334
  %2776 = vmatpush.bf16.msra.mxu0 %v2334
  %2777 = vmatpush.bf16.msra.mxu0 %v2333
  %2778 = vmatmul.bf16.gmra.mxu0 %v2562
  %v2779 = vpop.f32.mrf.mxu0
  %v2780 = vadd.f32 %v2731, %v2779
  %v2781 = vpop.f32.mrf.mxu0
  %v2782 = vadd.f32 %v2733, %v2781
  %2783 = vmatmul.bf16.gmra.mxu0 %v2566
  %v2784 = vpop.f32.mrf.mxu0
  %v2785 = vadd.f32 %v2736, %v2784
  %v2786 = vpop.f32.mrf.mxu0
  %v2787 = vadd.f32 %v2738, %v2786
  %2788 = vmatmul.bf16.gmra.mxu0 %v2570
  %v2789 = vpop.f32.mrf.mxu0
  %v2790 = vadd.f32 %v2741, %v2789
  %v2791 = vpop.f32.mrf.mxu0
  %v2792 = vadd.f32 %v2743, %v2791
  %2793 = vmatmul.bf16.gmra.mxu0 %v2574
  %v2794 = vpop.f32.mrf.mxu0
  %v2795 = vadd.f32 %v2746, %v2794
  %v2796 = vpop.f32.mrf.mxu0
  %v2797 = vadd.f32 %v2748, %v2796
  %2798 = vmatmul.bf16.gmra.mxu0 %v2578
  %v2799 = vpop.f32.mrf.mxu0
  %v2800 = vadd.f32 %v2751, %v2799
  %v2801 = vpop.f32.mrf.mxu0
  %v2802 = vadd.f32 %v2753, %v2801
  %2803 = vmatmul.bf16.gmra.mxu0 %v2582
  %v2804 = vpop.f32.mrf.mxu0
  %v2805 = vadd.f32 %v2756, %v2804
  %v2806 = vpop.f32.mrf.mxu0
  %v2807 = vadd.f32 %v2758, %v2806
  %2808 = vmatmul.bf16.gmra.mxu0 %v2586
  %v2809 = vpop.f32.mrf.mxu0
  %v2810 = vadd.f32 %v2761, %v2809
  %v2811 = vpop.f32.mrf.mxu0
  %v2812 = vadd.f32 %v2763, %v2811
  %2813 = vmatmul.bf16.gmra.mxu0 %v2590
  %v2814 = vpop.f32.mrf.mxu0
  %v2815 = vadd.f32 %v2766, %v2814
  %v2816 = vpop.f32.mrf.mxu0
  %v2817 = vadd.f32 %v2768, %v2816
  %2818 = vdwg.mxu0
  %v2819 = vmax.f32 %v2780, 0.0
  %v2820 = vmax.f32 %v2782, 0.0
  %v2821 = vmax.f32 %v2785, 0.0
  %v2822 = vmax.f32 %v2787, 0.0
  %v2823 = vmax.f32 %v2790, 0.0
  %v2824 = vmax.f32 %v2792, 0.0
  %v2825 = vmax.f32 %v2795, 0.0
  %v2826 = vmax.f32 %v2797, 0.0
  %v2827 = vmax.f32 %v2800, 0.0
  %v2828 = vmax.f32 %v2802, 0.0
  %v2829 = vmax.f32 %v2805, 0.0
  %v2830 = vmax.f32 %v2807, 0.0
  %v2831 = vmax.f32 %v2810, 0.0
  %v2832 = vmax.f32 %v2812, 0.0
  %v2833 = vmax.f32 %v2815, 0.0
  %v2834 = vmax.f32 %v2817, 0.0
  %v2835 = vpack.c.bf16 %v2820, %v2819
  %v2836 = vpack.c.bf16 %v2822, %v2821
  %v2837 = vpack.c.bf16 %v2824, %v2823
  %v2838 = vpack.c.bf16 %v2826, %v2825
  %v2839 = vpack.c.bf16 %v2828, %v2827
  %v2840 = vpack.c.bf16 %v2830, %v2829
  %v2841 = vpack.c.bf16 %v2832, %v2831
  %v2842 = vpack.c.bf16 %v2834, %v2833
  %v2843 = vld [vmem:[%s8] sm:$0xf]
  %v2844 = vld [vmem:[%s8 + $0x4] sm:$0xf]
  %v2845 = vld [vmem:[%s8 + $0x8] sm:$0xf]
  %v2846 = vld [vmem:[%s8 + $0xc] sm:$0xf]
  %v2847 = vld [vmem:[%s8 + $0x10] sm:$0xf]
  %v2848 = vld [vmem:[%s8 + $0x14] sm:$0xf]
  %v2849 = vld [vmem:[%s8 + $0x18] sm:$0xf]
  %v2850 = vld [vmem:[%s8 + $0x1c] sm:$0xf]
  %v2851 = vld [vmem:[%s8 + $0x20] sm:$0xf]
  %v2852 = vld [vmem:[%s8 + $0x24] sm:$0xf]
  %v2853 = vld [vmem:[%s8 + $0x28] sm:$0xf]
  %v2854 = vld [vmem:[%s8 + $0x2c] sm:$0xf]
  %v2855 = vld [vmem:[%s8 + $0x30] sm:$0xf]
  %v2856 = vld [vmem:[%s8 + $0x34] sm:$0xf]
  %v2857 = vld [vmem:[%s8 + $0x38] sm:$0xf]
  %v2858 = vld [vmem:[%s8 + $0x3c] sm:$0xf]
  %v2859 = vld [vmem:[%s9] sm:$0xff]
  %v2860 = vld [vmem:[%s9 + $0x8] sm:$0xff]
  %v2861 = vld [vmem:[%s9 + $0x10] sm:$0xff]
  %v2862 = vld [vmem:[%s9 + $0x18] sm:$0xff]
  %v2863 = vld [vmem:[%s9 + $0x20] sm:$0xff]
  %v2864 = vld [vmem:[%s9 + $0x28] sm:$0xff]
  %v2865 = vld [vmem:[%s9 + $0x30] sm:$0xff]
  %v2866 = vld [vmem:[%s9 + $0x38] sm:$0xff]
  %v2867 = vld [vmem:[%s9 + $0x40] sm:$0xff]
  %v2868 = vld [vmem:[%s9 + $0x48] sm:$0xff]
  %v2869 = vld [vmem:[%s9 + $0x50] sm:$0xff]
  %v2870 = vld [vmem:[%s9 + $0x58] sm:$0xff]
  %v2871 = vld [vmem:[%s9 + $0x60] sm:$0xff]
  %v2872 = vld [vmem:[%s9 + $0x68] sm:$0xff]
  %v2873 = vld [vmem:[%s9 + $0x70] sm:$0xff]
  %v2874 = vld [vmem:[%s9 + $0x78] sm:$0xff]
  %2876 = vset.pattern.permute.xlu0 0
  %2877 = vperm.xlu0 %2876, %v2859
  %v2878 = vpop.permute.xlu0 %2877
  %2881 = vset.pattern.permute.xlu0 0
  %2882 = vperm.xlu0 %2881, %v2860
  %v2883 = vpop.permute.xlu0 %2882
  %2886 = vset.pattern.permute.xlu0 0
  %2887 = vperm.xlu0 %2886, %v2861
  %v2888 = vpop.permute.xlu0 %2887
  %2891 = vset.pattern.permute.xlu0 0
  %2892 = vperm.xlu0 %2891, %v2862
  %v2893 = vpop.permute.xlu0 %2892
  %2896 = vset.pattern.permute.xlu0 0
  %2897 = vperm.xlu0 %2896, %v2863
  %v2898 = vpop.permute.xlu0 %2897
  %2901 = vset.pattern.permute.xlu0 0
  %2902 = vperm.xlu0 %2901, %v2864
  %v2903 = vpop.permute.xlu0 %2902
  %2906 = vset.pattern.permute.xlu0 0
  %2907 = vperm.xlu0 %2906, %v2865
  %v2908 = vpop.permute.xlu0 %2907
  %2911 = vset.pattern.permute.xlu0 0
  %2912 = vperm.xlu0 %2911, %v2866
  %v2913 = vpop.permute.xlu0 %2912
  %2916 = vset.pattern.permute.xlu0 0
  %2917 = vperm.xlu0 %2916, %v2867
  %v2918 = vpop.permute.xlu0 %2917
  %2921 = vset.pattern.permute.xlu0 0
  %2922 = vperm.xlu0 %2921, %v2868
  %v2923 = vpop.permute.xlu0 %2922
  %2926 = vset.pattern.permute.xlu0 0
  %2927 = vperm.xlu0 %2926, %v2869
  %v2928 = vpop.permute.xlu0 %2927
  %2931 = vset.pattern.permute.xlu0 0
  %2932 = vperm.xlu0 %2931, %v2870
  %v2933 = vpop.permute.xlu0 %2932
  %2936 = vset.pattern.permute.xlu0 0
  %2937 = vperm.xlu0 %2936, %v2871
  %v2938 = vpop.permute.xlu0 %2937
  %2941 = vset.pattern.permute.xlu0 0
  %2942 = vperm.xlu0 %2941, %v2872
  %v2943 = vpop.permute.xlu0 %2942
  %2946 = vset.pattern.permute.xlu0 0
  %2947 = vperm.xlu0 %2946, %v2873
  %v2948 = vpop.permute.xlu0 %2947
  %2951 = vset.pattern.permute.xlu0 0
  %2952 = vperm.xlu0 %2951, %v2874
  %v2953 = vpop.permute.xlu0 %2952
  %v2971 = vunpack.c.l.b16 %v2843
  %v2972 = vunpack.c.l.b16 %v2844
  %v2973 = vunpack.c.l.b16 %v2845
  %v2974 = vunpack.c.l.b16 %v2846
  %v2975 = vunpack.c.l.b16 %v2847
  %v2976 = vunpack.c.l.b16 %v2848
  %v2977 = vunpack.c.l.b16 %v2849
  %v2978 = vunpack.c.l.b16 %v2850
  %v2979 = vunpack.c.l.b16 %v2851
  %v2980 = vunpack.c.l.b16 %v2852
  %v2981 = vunpack.c.l.b16 %v2853
  %v2982 = vunpack.c.l.b16 %v2854
  %v2983 = vunpack.c.l.b16 %v2855
  %v2984 = vunpack.c.l.b16 %v2856
  %v2985 = vunpack.c.l.b16 %v2857
  %v2986 = vunpack.c.l.b16 %v2858
  %v2987 = vpack.c.b16 %v2972, %v2971
  %v2988 = vpack.c.b16 %v2974, %v2973
  %v2989 = vpack.c.b16 %v2976, %v2975
  %v2990 = vpack.c.b16 %v2978, %v2977
  %v2991 = vpack.c.b16 %v2980, %v2979
  %v2992 = vpack.c.b16 %v2982, %v2981
  %v2993 = vpack.c.b16 %v2984, %v2983
  %v2994 = vpack.c.b16 %v2986, %v2985
  %3003 = vmatpush.bf16.msra.mxu0 %v2842
  %3004 = vmatpush.bf16.msra.mxu0 %v2841
  %3005 = vmatpush.bf16.msra.mxu0 %v2840
  %3006 = vmatpush.bf16.msra.mxu0 %v2839
  %3007 = vmatpush.bf16.msra.mxu0 %v2838
  %3008 = vmatpush.bf16.msra.mxu0 %v2837
  %3009 = vmatpush.bf16.msra.mxu0 %v2836
  %3010 = vmatpush.bf16.msra.mxu0 %v2835
  %3011 = vmatmul.bf16.gmra.mxu0 %v2987
  %v3012 = vpop.f32.mrf.mxu0
  %v3013 = vadd.f32 %v2878, %v3012
  %v3014 = vpop.f32.mrf.mxu0
  %v3015 = vadd.f32 %v2883, %v3014
  %3016 = vmatmul.bf16.gmra.mxu0 %v2988
  %v3017 = vpop.f32.mrf.mxu0
  %v3018 = vadd.f32 %v2888, %v3017
  %v3019 = vpop.f32.mrf.mxu0
  %v3020 = vadd.f32 %v2893, %v3019
  %3021 = vmatmul.bf16.gmra.mxu0 %v2989
  %v3022 = vpop.f32.mrf.mxu0
  %v3023 = vadd.f32 %v2898, %v3022
  %v3024 = vpop.f32.mrf.mxu0
  %v3025 = vadd.f32 %v2903, %v3024
  %3026 = vmatmul.bf16.gmra.mxu0 %v2990
  %v3027 = vpop.f32.mrf.mxu0
  %v3028 = vadd.f32 %v2908, %v3027
  %v3029 = vpop.f32.mrf.mxu0
  %v3030 = vadd.f32 %v2913, %v3029
  %3031 = vmatmul.bf16.gmra.mxu0 %v2991
  %v3032 = vpop.f32.mrf.mxu0
  %v3033 = vadd.f32 %v2918, %v3032
  %v3034 = vpop.f32.mrf.mxu0
  %v3035 = vadd.f32 %v2923, %v3034
  %3036 = vmatmul.bf16.gmra.mxu0 %v2992
  %v3037 = vpop.f32.mrf.mxu0
  %v3038 = vadd.f32 %v2928, %v3037
  %v3039 = vpop.f32.mrf.mxu0
  %v3040 = vadd.f32 %v2933, %v3039
  %3041 = vmatmul.bf16.gmra.mxu0 %v2993
  %v3042 = vpop.f32.mrf.mxu0
  %v3043 = vadd.f32 %v2938, %v3042
  %v3044 = vpop.f32.mrf.mxu0
  %v3045 = vadd.f32 %v2943, %v3044
  %3046 = vmatmul.bf16.gmra.mxu0 %v2994
  %v3047 = vpop.f32.mrf.mxu0
  %v3048 = vadd.f32 %v2948, %v3047
  %v3049 = vpop.f32.mrf.mxu0
  %v3050 = vadd.f32 %v2953, %v3049
  %3051 = vdwg.mxu0
  %v3052 = vmax.f32 %v3013, 0.0
  %v3053 = vmax.f32 %v3015, 0.0
  %v3054 = vmax.f32 %v3018, 0.0
  %v3055 = vmax.f32 %v3020, 0.0
  %v3056 = vmax.f32 %v3023, 0.0
  %v3057 = vmax.f32 %v3025, 0.0
  %v3058 = vmax.f32 %v3028, 0.0
  %v3059 = vmax.f32 %v3030, 0.0
  %v3060 = vmax.f32 %v3033, 0.0
  %v3061 = vmax.f32 %v3035, 0.0
  %v3062 = vmax.f32 %v3038, 0.0
  %v3063 = vmax.f32 %v3040, 0.0
  %v3064 = vmax.f32 %v3043, 0.0
  %v3065 = vmax.f32 %v3045, 0.0
  %v3066 = vmax.f32 %v3048, 0.0
  %v3067 = vmax.f32 %v3050, 0.0
  %v3068 = vpack.c.bf16 %v3053, %v3052
  %v3069 = vpack.c.bf16 %v3055, %v3054
  %v3070 = vpack.c.bf16 %v3057, %v3056
  %v3071 = vpack.c.bf16 %v3059, %v3058
  %v3072 = vpack.c.bf16 %v3061, %v3060
  %v3073 = vpack.c.bf16 %v3063, %v3062
  %v3074 = vpack.c.bf16 %v3065, %v3064
  %v3075 = vpack.c.bf16 %v3067, %v3066
  %v3076 = vld [vmem:[%s10] sm:$0xf]
  %v3077 = vld [vmem:[%s10 + $0x4] sm:$0xf]
  %v3078 = vld [vmem:[%s11] sm:$0xff]
  %v3079 = vld [vmem:[%s11 + $0x8] sm:$0xff]
  %3081 = vset.pattern.permute.xlu0 0
  %3082 = vperm.xlu0 %3081, %v3078
  %v3083 = vpop.permute.xlu0 %3082
  %3086 = vset.pattern.permute.xlu0 0
  %3087 = vperm.xlu0 %3086, %v3079
  %v3088 = vpop.permute.xlu0 %3087
  %v3092 = vunpack.c.l.b16 %v3076
  %v3093 = vunpack.c.l.b16 %v3077
  %v3094 = vpack.c.b16 %v3093, %v3092
  %3096 = vmatpush.bf16.msra.mxu0 %v3075
  %3097 = vmatpush.bf16.msra.mxu0 %v3074
  %3098 = vmatpush.bf16.msra.mxu0 %v3073
  %3099 = vmatpush.bf16.msra.mxu0 %v3072
  %3100 = vmatpush.bf16.msra.mxu0 %v3071
  %3101 = vmatpush.bf16.msra.mxu0 %v3070
  %3102 = vmatpush.bf16.msra.mxu0 %v3069
  %3103 = vmatpush.bf16.msra.mxu0 %v3068
  %3104 = vmatmul.bf16.gmra.mxu0 %v3094
  %v3105 = vpop.f32.mrf.mxu0
  %v3106 = vadd.f32 %v3083, %v3105
  %v3107 = vpop.f32.mrf.mxu0
  %v3108 = vadd.f32 %v3088, %v3107
  %3109 = vdwg.mxu0
  %vm3110 = vcmask 15360
  %3111 = vst.msk [vmem:[%s12] sm:$0xff] %vm3110, %v3106
  %3112 = vst.msk [vmem:[%s12 + $0x8] sm:$0xff] %vm3110, %v3108
  // Predicated region
  $region50: #{classical_net_conv_forward.1} parent=0 // pred_check
    _
  $region51: #{classical_net_conv_forward.1} parent=0 // pred_check_branch
    %3114 = sbr.rel (0) target = $region53
  $region52: #{classical_net_conv_forward.1} parent=0 // pred_region
    _
  $region53: #{classical_net_conv_forward.1} parent=0 // pred_fallthru
    _
  // Predicated region
  $region54: #{classical_net_conv_forward.1} parent=0 // pred_check
    _
  $region55: #{classical_net_conv_forward.1} parent=0 // pred_check_branch
    %3116 = sbr.rel (0) target = $region57
  $region56: #{classical_net_conv_forward.1} parent=0 // pred_region
    _
  $region57: #{classical_net_conv_forward.1} parent=0 // pred_fallthru
    _

</llo_original>
